<compile_context>
chip_gen: v5e
topology: v5e:2x2
jax: 0.10.0
libtpu: 0.0.40
codegen_flags: <defaults>
</compile_context>

<pallas_src>
import functools
import math

import jax
import jax.numpy as jnp
from jax import lax
from jax.experimental import pallas as pl
from jax.experimental.pallas import tpu as pltpu


def bert_attention_kernel(x_ref, mask_ref,
                          wq_ref, bq_ref, wkv_ref, bkv_ref,
                          wo_ref, bo_ref, gamma_ref, beta_ref,
                          out_ref,
                          ctx_ref, k_cache_ref, v_cache_ref,
                          *, num_heads, head_dim, block_q, ln_eps):
    qi = pl.program_id(1)
    hidden = num_heads * head_dim
    S = k_cache_ref.shape[1]

    # ---- K/V for the whole sequence: one fused (H, 2H) matmul per batch row,
    #      cached head-major (NH, S, d) in bf16 VMEM scratch across the q axis.
    #      NOTE: this pl.when(qi == 0) guard is only correct while the q axis runs
    #      sequentially from 0 on each core (batch axis is the parallel one). ----
    @pl.when(qi == 0)
    def _():
        x_all = x_ref[0].astype(jnp.bfloat16)                                # (S, H)
        kv = jnp.dot(x_all, wkv_ref[...],
                     preferred_element_type=jnp.float32) + bkv_ref[0]        # (S, 2H)
        for h in range(num_heads):
            lo = h * head_dim
            k_cache_ref[h] = kv[:, lo:lo + head_dim].astype(jnp.bfloat16)
            v_cache_ref[h] = kv[:, hidden + lo:hidden + lo + head_dim].astype(jnp.bfloat16)

    # ---- Query rows for this grid step, sliced from the resident full-seq block
    #      (no separate double-buffered query input). ----
    q_start = pl.multiple_of(qi * block_q, block_q)
    x_q = x_ref[0, pl.ds(q_start, block_q), :]                               # (TQ, H)
    x_q_f32 = x_q.astype(jnp.float32)                                        # residual path
    x_q_b = x_q.astype(jnp.bfloat16)                                         # MXU operand

    # ---- Q projection (1/sqrt(head_dim) pre-folded into Wq/bq in the wrapper) ----
    q = jnp.dot(x_q_b, wq_ref[...], preferred_element_type=jnp.float32) + bq_ref[0]
    qb = q.astype(jnp.bfloat16)                                              # (TQ, H)

    # Additive mask, broadcast once per query block (not per head).
    neg_mask = jnp.broadcast_to((1.0 - mask_ref[0]) * -10000.0, (block_q, S))

    # ---- per-head attention: leading-axis cache reads, normalize AFTER PV ----
    for h in range(num_heads):
        lo = h * head_dim
        qh = qb[:, lo:lo + head_dim]                 # (TQ, d) bf16 (static lane slice)
        kh = k_cache_ref[h]                          # (S, d)  bf16 (leading-axis index)
        vh = v_cache_ref[h]                          # (S, d)  bf16

        # QK^T contracting K's last axis directly (no explicit transpose).
        scores = lax.dot_general(
            qh, kh, dimension_numbers=(((1,), (1,)), ((), ())),
            preferred_element_type=jnp.float32)                              # (TQ, S)
        scores = scores + neg_mask

        m = jnp.max(scores, axis=-1, keepdims=True)
        p = jnp.exp(scores - m)                                              # un-normalized
        inv_denom = pl.reciprocal(jnp.sum(p, axis=-1, keepdims=True), approx=True)
        # TODO(synk): attention dropout omitted (eval-mode identity).

        # PV on un-normalized bf16 probabilities; scale the small (TQ, d) result.
        ctx_h = jnp.dot(p.astype(jnp.bfloat16), vh,
                        preferred_element_type=jnp.float32)                  # (TQ, d)
        ctx_ref[:, lo:lo + head_dim] = (ctx_h * inv_denom).astype(jnp.bfloat16)

    # ---- BertSelfOutput: dense -> (dropout skipped) -> residual -> LayerNorm ----
    o = jnp.dot(ctx_ref[...], wo_ref[...],
                preferred_element_type=jnp.float32) + bo_ref[0]
    # TODO(synk): hidden dropout omitted (eval-mode identity).
    y = o + x_q_f32
    mu = jnp.mean(y, axis=-1, keepdims=True)
    var = jnp.mean((y - mu) ** 2, axis=-1, keepdims=True)
    yn = (y - mu) * lax.rsqrt(var + ln_eps)
    out_ref[0] = (yn * gamma_ref[0] + beta_ref[0]).astype(out_ref.dtype)


def _vmem_capacity_bytes():
    """Physical VMEM per TensorCore; conservative (v7x) fallback if unqueryable."""
    try:
        info = pltpu.get_tpu_info()
        cap = getattr(info, "vmem_capacity_bytes", None)
        if cap:
            return int(cap)
    except Exception:
        pass
    return 64 << 20


def _pick_block_q(S, vmem_cap):
    """Largest query tile that divides S, capped by the VMEM generation."""
    max_tq = 512 if vmem_cap >= (100 << 20) else 256   # v5e/v6e: 512; v7x: 256
    if S <= max_tq:
        return S
    for tq in (512, 384, 256, 224, 192, 160, 128, 96, 64, 32, 16, 8):
        if tq <= max_tq and S % tq == 0:
            return tq
    return S


def bert_attention(x, mask, params, *, num_heads, attention_scale=True, block_q=None):
    B, S, H = x.shape
    assert H % num_heads == 0
    head_dim = H // num_heads

    vmem_cap = _vmem_capacity_bytes()

    if block_q is None:
        block_q = _pick_block_q(S, vmem_cap)
    assert S % block_q == 0
    nqb = S // block_q

    kernel = functools.partial(
        bert_attention_kernel,
        num_heads=num_heads, head_dim=head_dim, block_q=block_q, ln_eps=1e-12)

    # bf16 weights (MXU operand dtype); 1/sqrt(d) folded into Wq/bq; K|V fused.
    scale = (1.0 / math.sqrt(head_dim)) if attention_scale else 1.0
    wq = (params["wq"] * scale).astype(jnp.bfloat16)
    bq = (params["bq"] * scale).astype(jnp.float32)
    wkv = jnp.concatenate([params["wk"], params["wv"]], axis=1).astype(jnp.bfloat16)
    bkv = jnp.concatenate([params["bk"], params["bv"]], axis=1).astype(jnp.float32)
    wo = params["wo"].astype(jnp.bfloat16)
    bo = params["bo"].astype(jnp.float32)
    gamma = params["gamma"].astype(jnp.float32)
    beta = params["beta"].astype(jnp.float32)

    mask3 = mask.reshape(B, 1, S).astype(jnp.float32)

    # ---- VMEM budget estimate (double-buffered blocks + caches + live tiles),
    #      clamped to ~85% of physical VMEM so the limit is valid on v7x. ----
    itemsize = jnp.dtype(x.dtype).itemsize
    d_pad = ((head_dim + 127) // 128) * 128                 # lane-padded head width
    est = (2 * (4 * H * H * 2 + 8 * H * 4)                  # double-buffered weights/vectors
           + 2 * (S * H * itemsize + S * 4)                 # double-buffered x + mask blocks
           + 2 * block_q * H * itemsize                     # double-buffered output block
           + 2 * num_heads * S * d_pad * 2                  # head-major bf16 K/V caches
           + block_q * H * 2                                # bf16 ctx slab
           + 2 * S * H * 4                                  # fused KV projection live value
           + 4 * block_q * H * 4                            # q / residual / o / y temporaries
           + 2 * block_q * S * 4)                           # scores + exp tile
    vmem_bytes = int(min(max(int(est * 1.5) + (2 << 20), 16 << 20),
                         int(vmem_cap * 0.85)))

    flops = B * (2 * S * H * H * 4             # Q + fused KV + output projections
                 + 2 * 2 * S * S * H)          # QK^T + PV over all heads
    transcendentals = B * (num_heads * S * S + 2 * S)
    bytes_accessed = (B * S * H * itemsize + B * S * H * itemsize  # x in, out
                      + 4 * H * H * 2 + 8 * H * 4 + B * S * 4)
    cost = pl.CostEstimate(flops=flops, transcendentals=transcendentals,
                           bytes_accessed=bytes_accessed)

    w_sq = pl.BlockSpec((H, H), lambda b, q: (0, 0))
    w_kv = pl.BlockSpec((H, 2 * H), lambda b, q: (0, 0))
    vec_h = pl.BlockSpec((1, H), lambda b, q: (0, 0))
    vec_2h = pl.BlockSpec((1, 2 * H), lambda b, q: (0, 0))

    return pl.pallas_call(
        kernel,
        out_shape=jax.ShapeDtypeStruct((B, S, H), x.dtype),
        grid=(B, nqb),
        in_specs=[
            pl.BlockSpec((1, S, H), lambda b, q: (b, 0, 0)),   # x, full sequence
            pl.BlockSpec((1, 1, S), lambda b, q: (b, 0, 0)),   # attention mask
            w_sq, vec_h,                                       # Wq (pre-scaled), bq
            w_kv, vec_2h,                                      # Wk|Wv fused, bk|bv
            w_sq, vec_h,                                       # Wo, bo
            vec_h, vec_h,                                      # LN gamma, beta
        ],
        out_specs=pl.BlockSpec((1, block_q, H), lambda b, q: (b, q, 0)),
        scratch_shapes=[
            pltpu.VMEM((block_q, H), jnp.bfloat16),             # bf16 ctx slab
            pltpu.VMEM((num_heads, S, head_dim), jnp.bfloat16), # K cache (head-major)
            pltpu.VMEM((num_heads, S, head_dim), jnp.bfloat16), # V cache (head-major)
        ],
        compiler_params=pltpu.CompilerParams(
            # Query axis is 'arbitrary' because the K/V scratch cache is reused
            # across it; batch axis is 'parallel' for megacore sharding.
            dimension_semantics=("parallel", "arbitrary"),
            vmem_limit_bytes=vmem_bytes),
        cost_estimate=cost,
    )(x, mask3, wq, bq, wkv, bkv, wo, bo, gamma, beta)


def _reference(x, mask, params, *, num_heads, attention_scale=True):
    """Pure-JAX f32 reference mirroring the PyTorch forward (eval mode)."""
    B, S, H = x.shape
    d = H // num_heads
    q = x @ params["wq"] + params["bq"][0]
    k = x @ params["wk"] + params["bk"][0]
    v = x @ params["wv"] + params["bv"][0]

    def split(t):  # (B,S,H) -> (B,nh,S,d)
        return t.reshape(B, S, num_heads, d).transpose(0, 2, 1, 3)

    qh, kh, vh = split(q), split(k), split(v)
    scores = jnp.einsum("bhqd,bhkd->bhqk", qh, kh)
    if attention_scale:
        scores = scores / math.sqrt(d)
    scores = scores + ((1.0 - mask)[:, None, None, :] * -10000.0)
    p = jax.nn.softmax(scores, axis=-1)
    ctx = jnp.einsum("bhqk,bhkd->bhqd", p, vh).transpose(0, 2, 1, 3).reshape(B, S, H)
    o = ctx @ params["wo"] + params["bo"][0]
    y = o + x
    mu = jnp.mean(y, axis=-1, keepdims=True)
    var = jnp.mean((y - mu) ** 2, axis=-1, keepdims=True)
    return (y - mu) / jnp.sqrt(var + 1e-12) * params["gamma"][0] + params["beta"][0]


if __name__ == "__main__":
    B, S, H, NH = 2, 8, 32, 4

    key = jax.random.PRNGKey(0)
    keys = jax.random.split(key, 10)

    # Deterministic synthetic parameters (shapes follow nn.Linear(H, H) / LayerNorm(H)).
    params = {
        "wq": 0.02 * jax.random.normal(keys[0], (H, H), jnp.float32),
        "bq": 0.01 * jax.random.normal(keys[1], (1, H), jnp.float32),
        "wk": 0.02 * jax.random.normal(keys[2], (H, H), jnp.float32),
        "bk": 0.01 * jax.random.normal(keys[3], (1, H), jnp.float32),
        "wv": 0.02 * jax.random.normal(keys[4], (H, H), jnp.float32),
        "bv": 0.01 * jax.random.normal(keys[5], (1, H), jnp.float32),
        "wo": 0.02 * jax.random.normal(keys[6], (H, H), jnp.float32),
        "bo": 0.01 * jax.random.normal(keys[7], (1, H), jnp.float32),
        "gamma": jnp.ones((1, H), jnp.float32),
        "beta": jnp.zeros((1, H), jnp.float32),
    }

    x = jax.random.normal(keys[8], (B, S, H), jnp.float32)
    mask = jnp.ones((B, S), jnp.float32)   # all positions attended

    out = bert_attention(x, mask, params, num_heads=NH)
    out = jax.block_until_ready(out)

    ref = _reference(x, mask, params, num_heads=NH)
    assert out.shape == (B, S, H)
    # Kernel uses bf16 MXU operands + approx EUP reciprocal (un-normalized softmax
    # scaled after PV); compare against the f32 reference with relaxed tolerance.
    assert jnp.allclose(out, ref, atol=2e-2, rtol=2e-2), "mismatch vs reference"

    print("KERNEL_OK")
</pallas_src>

<mosaic_0001>
module attributes {stable_mosaic.version = 11 : i64} {
  func.func @bert_attention_kernel(%arg0: i32, %arg1: i32, %arg2: memref<1x8x32xf32, #tpu.memory_space<vmem>>, %arg3: memref<1x1x8xf32, #tpu.memory_space<vmem>>, %arg4: memref<32x32xbf16, #tpu.memory_space<vmem>>, %arg5: memref<1x32xf32, #tpu.memory_space<vmem>>, %arg6: memref<32x64xbf16, #tpu.memory_space<vmem>>, %arg7: memref<1x64xf32, #tpu.memory_space<vmem>>, %arg8: memref<32x32xbf16, #tpu.memory_space<vmem>>, %arg9: memref<1x32xf32, #tpu.memory_space<vmem>>, %arg10: memref<1x32xf32, #tpu.memory_space<vmem>>, %arg11: memref<1x32xf32, #tpu.memory_space<vmem>>, %arg12: memref<1x8x32xf32, #tpu.memory_space<vmem>>, %arg13: memref<8x32xbf16, #tpu.memory_space<vmem>>, %arg14: memref<4x8x8xbf16, #tpu.memory_space<vmem>>, %arg15: memref<4x8x8xbf16, #tpu.memory_space<vmem>>) attributes {dimension_semantics = [#tpu.dimension_semantics<parallel>, #tpu.dimension_semantics<arbitrary>], iteration_bounds = array<i64: 2, 1>, scalar_prefetch = 0 : i64, scratch_operands = 3 : i64, tpu.core_type = #tpu.core_type<tc>, window_params = [{transform_indices = @transform_0, window_bounds = array<i64: 1, 8, 32>}, {transform_indices = @transform_1, window_bounds = array<i64: 1, 1, 8>}, {pipeline_mode = #tpu.pipeline_mode<synchronous>, transform_indices = @transform_2, window_bounds = array<i64: 32, 32>}, {pipeline_mode = #tpu.pipeline_mode<synchronous>, transform_indices = @transform_3, window_bounds = array<i64: 1, 32>}, {pipeline_mode = #tpu.pipeline_mode<synchronous>, transform_indices = @transform_4, window_bounds = array<i64: 32, 64>}, {pipeline_mode = #tpu.pipeline_mode<synchronous>, transform_indices = @transform_5, window_bounds = array<i64: 1, 64>}, {pipeline_mode = #tpu.pipeline_mode<synchronous>, transform_indices = @transform_6, window_bounds = array<i64: 32, 32>}, {pipeline_mode = #tpu.pipeline_mode<synchronous>, transform_indices = @transform_7, window_bounds = array<i64: 1, 32>}, {pipeline_mode = #tpu.pipeline_mode<synchronous>, transform_indices = @transform_8, window_bounds = array<i64: 1, 32>}, {pipeline_mode = #tpu.pipeline_mode<synchronous>, transform_indices = @transform_9, window_bounds = array<i64: 1, 32>}, {transform_indices = @transform_10, window_bounds = array<i64: 1, 8, 32>}]} {
    %c0_i32 = arith.constant 0 : i32
    %0 = arith.cmpi eq, %arg1, %c0_i32 : i32
    %1 = arith.extui %0 : i1 to i32
    %c0_i32_0 = arith.constant 0 : i32
    %2 = arith.cmpi ne, %1, %c0_i32_0 : i32
    scf.if %2 {
      %c0_72 = arith.constant 0 : index
      %c0_73 = arith.constant 0 : index
      %c0_74 = arith.constant 0 : index
      %149 = vector.load %arg2[%c0_72, %c0_73, %c0_74] : memref<1x8x32xf32, #tpu.memory_space<vmem>>, vector<1x8x32xf32>
      %150 = vector.shape_cast %149 : vector<1x8x32xf32> to vector<8x32xf32>
      %151 = arith.truncf %150 : vector<8x32xf32> to vector<8x32xbf16>
      %c0_75 = arith.constant 0 : index
      %c0_76 = arith.constant 0 : index
      %152 = vector.load %arg6[%c0_75, %c0_76] : memref<32x64xbf16, #tpu.memory_space<vmem>>, vector<32x64xbf16>
      %cst_77 = arith.constant dense<0.000000e+00> : vector<8x64xf32>
      %153 = tpu.matmul %151, %152, %cst_77 {dimension_numbers = #tpu.dot_dimension_numbers<[1], [0], [0], [1], [0, 0, 1, 1], [], []>} : vector<8x32xbf16>, vector<32x64xbf16>, vector<8x64xf32> -> vector<8x64xf32>
      %c0_78 = arith.constant 0 : index
      %c0_79 = arith.constant 0 : index
      %154 = vector.load %arg7[%c0_78, %c0_79] : memref<1x64xf32, #tpu.memory_space<vmem>>, vector<1x64xf32>
      %155 = vector.shape_cast %154 : vector<1x64xf32> to vector<64xf32>
      %156 = vector.shape_cast %155 : vector<64xf32> to vector<1x64xf32>
      %157 = vector.broadcast %156 : vector<1x64xf32> to vector<8x64xf32>
      %158 = arith.addf %153, %157 : vector<8x64xf32>
      %159 = vector.extract_strided_slice %158 {offsets = [0, 0], sizes = [8, 8], strides = [1, 1]} : vector<8x64xf32> to vector<8x8xf32>
      %160 = arith.truncf %159 : vector<8x8xf32> to vector<8x8xbf16>
      %c0_80 = arith.constant 0 : index
      %c0_81 = arith.constant 0 : index
      %c0_82 = arith.constant 0 : index
      %161 = vector.load %arg14[%c0_80, %c0_81, %c0_82] : memref<4x8x8xbf16, #tpu.memory_space<vmem>>, vector<1x8x8xbf16>
      %162 = vector.shape_cast %161 : vector<1x8x8xbf16> to vector<8x8xbf16>
      %163 = vector.shape_cast %160 : vector<8x8xbf16> to vector<1x8x8xbf16>
      tpu.vector_store %arg14[%c0_80, %c0_81, %c0_82], %163 {strides = array<i32>} : memref<4x8x8xbf16, #tpu.memory_space<vmem>>, vector<1x8x8xbf16>,
      %164 = vector.extract_strided_slice %158 {offsets = [0, 32], sizes = [8, 8], strides = [1, 1]} : vector<8x64xf32> to vector<8x8xf32>
      %165 = arith.truncf %164 : vector<8x8xf32> to vector<8x8xbf16>
      %c0_83 = arith.constant 0 : index
      %c0_84 = arith.constant 0 : index
      %c0_85 = arith.constant 0 : index
      %166 = vector.load %arg15[%c0_83, %c0_84, %c0_85] : memref<4x8x8xbf16, #tpu.memory_space<vmem>>, vector<1x8x8xbf16>
      %167 = vector.shape_cast %166 : vector<1x8x8xbf16> to vector<8x8xbf16>
      %168 = vector.shape_cast %165 : vector<8x8xbf16> to vector<1x8x8xbf16>
      tpu.vector_store %arg15[%c0_83, %c0_84, %c0_85], %168 {strides = array<i32>} : memref<4x8x8xbf16, #tpu.memory_space<vmem>>, vector<1x8x8xbf16>,
      %169 = vector.extract_strided_slice %158 {offsets = [0, 8], sizes = [8, 8], strides = [1, 1]} : vector<8x64xf32> to vector<8x8xf32>
      %170 = arith.truncf %169 : vector<8x8xf32> to vector<8x8xbf16>
      %c1_86 = arith.constant 1 : index
      %c0_87 = arith.constant 0 : index
      %c0_88 = arith.constant 0 : index
      %171 = vector.load %arg14[%c1_86, %c0_87, %c0_88] : memref<4x8x8xbf16, #tpu.memory_space<vmem>>, vector<1x8x8xbf16>
      %172 = vector.shape_cast %171 : vector<1x8x8xbf16> to vector<8x8xbf16>
      %173 = vector.shape_cast %170 : vector<8x8xbf16> to vector<1x8x8xbf16>
      tpu.vector_store %arg14[%c1_86, %c0_87, %c0_88], %173 {strides = array<i32>} : memref<4x8x8xbf16, #tpu.memory_space<vmem>>, vector<1x8x8xbf16>,
      %174 = vector.extract_strided_slice %158 {offsets = [0, 40], sizes = [8, 8], strides = [1, 1]} : vector<8x64xf32> to vector<8x8xf32>
      %175 = arith.truncf %174 : vector<8x8xf32> to vector<8x8xbf16>
      %c1_89 = arith.constant 1 : index
      %c0_90 = arith.constant 0 : index
      %c0_91 = arith.constant 0 : index
      %176 = vector.load %arg15[%c1_89, %c0_90, %c0_91] : memref<4x8x8xbf16, #tpu.memory_space<vmem>>, vector<1x8x8xbf16>
      %177 = vector.shape_cast %176 : vector<1x8x8xbf16> to vector<8x8xbf16>
      %178 = vector.shape_cast %175 : vector<8x8xbf16> to vector<1x8x8xbf16>
      tpu.vector_store %arg15[%c1_89, %c0_90, %c0_91], %178 {strides = array<i32>} : memref<4x8x8xbf16, #tpu.memory_space<vmem>>, vector<1x8x8xbf16>,
      %179 = vector.extract_strided_slice %158 {offsets = [0, 16], sizes = [8, 8], strides = [1, 1]} : vector<8x64xf32> to vector<8x8xf32>
      %180 = arith.truncf %179 : vector<8x8xf32> to vector<8x8xbf16>
      %c2_92 = arith.constant 2 : index
      %c0_93 = arith.constant 0 : index
      %c0_94 = arith.constant 0 : index
      %181 = vector.load %arg14[%c2_92, %c0_93, %c0_94] : memref<4x8x8xbf16, #tpu.memory_space<vmem>>, vector<1x8x8xbf16>
      %182 = vector.shape_cast %181 : vector<1x8x8xbf16> to vector<8x8xbf16>
      %183 = vector.shape_cast %180 : vector<8x8xbf16> to vector<1x8x8xbf16>
      tpu.vector_store %arg14[%c2_92, %c0_93, %c0_94], %183 {strides = array<i32>} : memref<4x8x8xbf16, #tpu.memory_space<vmem>>, vector<1x8x8xbf16>,
      %184 = vector.extract_strided_slice %158 {offsets = [0, 48], sizes = [8, 8], strides = [1, 1]} : vector<8x64xf32> to vector<8x8xf32>
      %185 = arith.truncf %184 : vector<8x8xf32> to vector<8x8xbf16>
      %c2_95 = arith.constant 2 : index
      %c0_96 = arith.constant 0 : index
      %c0_97 = arith.constant 0 : index
      %186 = vector.load %arg15[%c2_95, %c0_96, %c0_97] : memref<4x8x8xbf16, #tpu.memory_space<vmem>>, vector<1x8x8xbf16>
      %187 = vector.shape_cast %186 : vector<1x8x8xbf16> to vector<8x8xbf16>
      %188 = vector.shape_cast %185 : vector<8x8xbf16> to vector<1x8x8xbf16>
      tpu.vector_store %arg15[%c2_95, %c0_96, %c0_97], %188 {strides = array<i32>} : memref<4x8x8xbf16, #tpu.memory_space<vmem>>, vector<1x8x8xbf16>,
      %189 = vector.extract_strided_slice %158 {offsets = [0, 24], sizes = [8, 8], strides = [1, 1]} : vector<8x64xf32> to vector<8x8xf32>
      %190 = arith.truncf %189 : vector<8x8xf32> to vector<8x8xbf16>
      %c3_98 = arith.constant 3 : index
      %c0_99 = arith.constant 0 : index
      %c0_100 = arith.constant 0 : index
      %191 = vector.load %arg14[%c3_98, %c0_99, %c0_100] : memref<4x8x8xbf16, #tpu.memory_space<vmem>>, vector<1x8x8xbf16>
      %192 = vector.shape_cast %191 : vector<1x8x8xbf16> to vector<8x8xbf16>
      %193 = vector.shape_cast %190 : vector<8x8xbf16> to vector<1x8x8xbf16>
      tpu.vector_store %arg14[%c3_98, %c0_99, %c0_100], %193 {strides = array<i32>} : memref<4x8x8xbf16, #tpu.memory_space<vmem>>, vector<1x8x8xbf16>,
      %194 = vector.extract_strided_slice %158 {offsets = [0, 56], sizes = [8, 8], strides = [1, 1]} : vector<8x64xf32> to vector<8x8xf32>
      %195 = arith.truncf %194 : vector<8x8xf32> to vector<8x8xbf16>
      %c3_101 = arith.constant 3 : index
      %c0_102 = arith.constant 0 : index
      %c0_103 = arith.constant 0 : index
      %196 = vector.load %arg15[%c3_101, %c0_102, %c0_103] : memref<4x8x8xbf16, #tpu.memory_space<vmem>>, vector<1x8x8xbf16>
      %197 = vector.shape_cast %196 : vector<1x8x8xbf16> to vector<8x8xbf16>
      %198 = vector.shape_cast %195 : vector<8x8xbf16> to vector<1x8x8xbf16>
      tpu.vector_store %arg15[%c3_101, %c0_102, %c0_103], %198 {strides = array<i32>} : memref<4x8x8xbf16, #tpu.memory_space<vmem>>, vector<1x8x8xbf16>,
    } else {
    }
    %c8_i32 = arith.constant 8 : i32
    %3 = arith.muli %arg1, %c8_i32 : i32
    %4 = tpu.assume_multiple %3, 8 : i32
    %c0 = arith.constant 0 : index
    %5 = arith.index_cast %4 : i32 to index
    %c0_1 = arith.constant 0 : index
    %6 = vector.load %arg2[%c0, %5, %c0_1] : memref<1x8x32xf32, #tpu.memory_space<vmem>>, vector<1x8x32xf32>
    %7 = vector.shape_cast %6 : vector<1x8x32xf32> to vector<8x32xf32>
    %8 = arith.truncf %7 : vector<8x32xf32> to vector<8x32xbf16>
    %c0_2 = arith.constant 0 : index
    %c0_3 = arith.constant 0 : index
    %9 = vector.load %arg4[%c0_2, %c0_3] : memref<32x32xbf16, #tpu.memory_space<vmem>>, vector<32x32xbf16>
    %cst = arith.constant dense<0.000000e+00> : vector<8x32xf32>
    %10 = tpu.matmul %8, %9, %cst {dimension_numbers = #tpu.dot_dimension_numbers<[1], [0], [0], [1], [0, 0, 1, 1], [], []>} : vector<8x32xbf16>, vector<32x32xbf16>, vector<8x32xf32> -> vector<8x32xf32>
    %c0_4 = arith.constant 0 : index
    %c0_5 = arith.constant 0 : index
    %11 = vector.load %arg5[%c0_4, %c0_5] : memref<1x32xf32, #tpu.memory_space<vmem>>, vector<1x32xf32>
    %12 = vector.shape_cast %11 : vector<1x32xf32> to vector<32xf32>
    %13 = vector.shape_cast %12 : vector<32xf32> to vector<1x32xf32>
    %14 = vector.broadcast %13 : vector<1x32xf32> to vector<8x32xf32>
    %15 = arith.addf %10, %14 : vector<8x32xf32>
    %16 = arith.truncf %15 : vector<8x32xf32> to vector<8x32xbf16>
    %c0_6 = arith.constant 0 : index
    %c0_7 = arith.constant 0 : index
    %c0_8 = arith.constant 0 : index
    %17 = vector.load %arg3[%c0_6, %c0_7, %c0_8] : memref<1x1x8xf32, #tpu.memory_space<vmem>>, vector<1x1x8xf32>
    %18 = vector.shape_cast %17 : vector<1x1x8xf32> to vector<1x8xf32>
    %cst_9 = arith.constant 1.000000e+00 : f32
    %19 = vector.broadcast %cst_9 : f32 to vector<1x8xf32>
    %20 = arith.subf %19, %18 : vector<1x8xf32>
    %cst_10 = arith.constant -1.000000e+04 : f32
    %21 = vector.broadcast %cst_10 : f32 to vector<1x8xf32>
    %22 = arith.mulf %20, %21 : vector<1x8xf32>
    %23 = vector.shape_cast %22 : vector<1x8xf32> to vector<1x8xf32>
    %24 = vector.broadcast %23 : vector<1x8xf32> to vector<8x8xf32>
    %25 = vector.extract_strided_slice %16 {offsets = [0, 0], sizes = [8, 8], strides = [1, 1]} : vector<8x32xbf16> to vector<8x8xbf16>
    %c0_11 = arith.constant 0 : index
    %c0_12 = arith.constant 0 : index
    %c0_13 = arith.constant 0 : index
    %26 = vector.load %arg14[%c0_11, %c0_12, %c0_13] : memref<4x8x8xbf16, #tpu.memory_space<vmem>>, vector<1x8x8xbf16>
    %27 = vector.shape_cast %26 : vector<1x8x8xbf16> to vector<8x8xbf16>
    %c0_14 = arith.constant 0 : index
    %c0_15 = arith.constant 0 : index
    %c0_16 = arith.constant 0 : index
    %28 = vector.load %arg15[%c0_14, %c0_15, %c0_16] : memref<4x8x8xbf16, #tpu.memory_space<vmem>>, vector<1x8x8xbf16>
    %29 = vector.shape_cast %28 : vector<1x8x8xbf16> to vector<8x8xbf16>
    %cst_17 = arith.constant dense<0.000000e+00> : vector<8x8xf32>
    %30 = tpu.matmul %25, %27, %cst_17 {dimension_numbers = #tpu.dot_dimension_numbers<[1], [1], [0], [0], [0, 0, 1, 0], [], []>} : vector<8x8xbf16>, vector<8x8xbf16>, vector<8x8xf32> -> vector<8x8xf32>
    %31 = arith.addf %30, %24 : vector<8x8xf32>
    %cst_18 = arith.constant dense<0xFF800000> : vector<8xf32>
    %32 = vector.multi_reduction <maximumf>, %31, %cst_18 [1] : vector<8x8xf32> to vector<8xf32>
    %33 = vector.shape_cast %32 : vector<8xf32> to vector<8x1xf32>
    %34 = vector.broadcast %33 : vector<8x1xf32> to vector<8x8xf32>
    %35 = arith.subf %31, %34 : vector<8x8xf32>
    %36 = math.exp %35 : vector<8x8xf32>
    %cst_19 = arith.constant dense<0.000000e+00> : vector<8xf32>
    %37 = vector.multi_reduction <add>, %36, %cst_19 [1] : vector<8x8xf32> to vector<8xf32>
    %38 = vector.shape_cast %37 : vector<8xf32> to vector<8x1xf32>
    %39 = tpu.reciprocal %38 {approx = true} : vector<8x1xf32> -> vector<8x1xf32>
    %40 = arith.truncf %36 : vector<8x8xf32> to vector<8x8xbf16>
    %cst_20 = arith.constant dense<0.000000e+00> : vector<8x8xf32>
    %41 = tpu.matmul %40, %29, %cst_20 {dimension_numbers = #tpu.dot_dimension_numbers<[1], [0], [0], [1], [0, 0, 1, 1], [], []>} : vector<8x8xbf16>, vector<8x8xbf16>, vector<8x8xf32> -> vector<8x8xf32>
    %42 = vector.broadcast %39 : vector<8x1xf32> to vector<8x8xf32>
    %43 = arith.mulf %41, %42 : vector<8x8xf32>
    %44 = arith.truncf %43 : vector<8x8xf32> to vector<8x8xbf16>
    %c0_21 = arith.constant 0 : index
    %c0_22 = arith.constant 0 : index
    %45 = vector.load %arg13[%c0_21, %c0_22] : memref<8x32xbf16, #tpu.memory_space<vmem>>, vector<8x8xbf16>
    tpu.vector_store %arg13[%c0_21, %c0_22], %44 {strides = array<i32>} : memref<8x32xbf16, #tpu.memory_space<vmem>>, vector<8x8xbf16>,
    %46 = vector.extract_strided_slice %16 {offsets = [0, 8], sizes = [8, 8], strides = [1, 1]} : vector<8x32xbf16> to vector<8x8xbf16>
    %c1 = arith.constant 1 : index
    %c0_23 = arith.constant 0 : index
    %c0_24 = arith.constant 0 : index
    %47 = vector.load %arg14[%c1, %c0_23, %c0_24] : memref<4x8x8xbf16, #tpu.memory_space<vmem>>, vector<1x8x8xbf16>
    %48 = vector.shape_cast %47 : vector<1x8x8xbf16> to vector<8x8xbf16>
    %c1_25 = arith.constant 1 : index
    %c0_26 = arith.constant 0 : index
    %c0_27 = arith.constant 0 : index
    %49 = vector.load %arg15[%c1_25, %c0_26, %c0_27] : memref<4x8x8xbf16, #tpu.memory_space<vmem>>, vector<1x8x8xbf16>
    %50 = vector.shape_cast %49 : vector<1x8x8xbf16> to vector<8x8xbf16>
    %cst_28 = arith.constant dense<0.000000e+00> : vector<8x8xf32>
    %51 = tpu.matmul %46, %48, %cst_28 {dimension_numbers = #tpu.dot_dimension_numbers<[1], [1], [0], [0], [0, 0, 1, 0], [], []>} : vector<8x8xbf16>, vector<8x8xbf16>, vector<8x8xf32> -> vector<8x8xf32>
    %52 = arith.addf %51, %24 : vector<8x8xf32>
    %cst_29 = arith.constant dense<0xFF800000> : vector<8xf32>
    %53 = vector.multi_reduction <maximumf>, %52, %cst_29 [1] : vector<8x8xf32> to vector<8xf32>
    %54 = vector.shape_cast %53 : vector<8xf32> to vector<8x1xf32>
    %55 = vector.broadcast %54 : vector<8x1xf32> to vector<8x8xf32>
    %56 = arith.subf %52, %55 : vector<8x8xf32>
    %57 = math.exp %56 : vector<8x8xf32>
    %cst_30 = arith.constant dense<0.000000e+00> : vector<8xf32>
    %58 = vector.multi_reduction <add>, %57, %cst_30 [1] : vector<8x8xf32> to vector<8xf32>
    %59 = vector.shape_cast %58 : vector<8xf32> to vector<8x1xf32>
    %60 = tpu.reciprocal %59 {approx = true} : vector<8x1xf32> -> vector<8x1xf32>
    %61 = arith.truncf %57 : vector<8x8xf32> to vector<8x8xbf16>
    %cst_31 = arith.constant dense<0.000000e+00> : vector<8x8xf32>
    %62 = tpu.matmul %61, %50, %cst_31 {dimension_numbers = #tpu.dot_dimension_numbers<[1], [0], [0], [1], [0, 0, 1, 1], [], []>} : vector<8x8xbf16>, vector<8x8xbf16>, vector<8x8xf32> -> vector<8x8xf32>
    %63 = vector.broadcast %60 : vector<8x1xf32> to vector<8x8xf32>
    %64 = arith.mulf %62, %63 : vector<8x8xf32>
    %65 = arith.truncf %64 : vector<8x8xf32> to vector<8x8xbf16>
    %c0_32 = arith.constant 0 : index
    %c8 = arith.constant 8 : index
    %66 = vector.load %arg13[%c0_32, %c8] : memref<8x32xbf16, #tpu.memory_space<vmem>>, vector<8x8xbf16>
    tpu.vector_store %arg13[%c0_32, %c8], %65 {strides = array<i32>} : memref<8x32xbf16, #tpu.memory_space<vmem>>, vector<8x8xbf16>,
    %67 = vector.extract_strided_slice %16 {offsets = [0, 16], sizes = [8, 8], strides = [1, 1]} : vector<8x32xbf16> to vector<8x8xbf16>
    %c2 = arith.constant 2 : index
    %c0_33 = arith.constant 0 : index
    %c0_34 = arith.constant 0 : index
    %68 = vector.load %arg14[%c2, %c0_33, %c0_34] : memref<4x8x8xbf16, #tpu.memory_space<vmem>>, vector<1x8x8xbf16>
    %69 = vector.shape_cast %68 : vector<1x8x8xbf16> to vector<8x8xbf16>
    %c2_35 = arith.constant 2 : index
    %c0_36 = arith.constant 0 : index
    %c0_37 = arith.constant 0 : index
    %70 = vector.load %arg15[%c2_35, %c0_36, %c0_37] : memref<4x8x8xbf16, #tpu.memory_space<vmem>>, vector<1x8x8xbf16>
    %71 = vector.shape_cast %70 : vector<1x8x8xbf16> to vector<8x8xbf16>
    %cst_38 = arith.constant dense<0.000000e+00> : vector<8x8xf32>
    %72 = tpu.matmul %67, %69, %cst_38 {dimension_numbers = #tpu.dot_dimension_numbers<[1], [1], [0], [0], [0, 0, 1, 0], [], []>} : vector<8x8xbf16>, vector<8x8xbf16>, vector<8x8xf32> -> vector<8x8xf32>
    %73 = arith.addf %72, %24 : vector<8x8xf32>
    %cst_39 = arith.constant dense<0xFF800000> : vector<8xf32>
    %74 = vector.multi_reduction <maximumf>, %73, %cst_39 [1] : vector<8x8xf32> to vector<8xf32>
    %75 = vector.shape_cast %74 : vector<8xf32> to vector<8x1xf32>
    %76 = vector.broadcast %75 : vector<8x1xf32> to vector<8x8xf32>
    %77 = arith.subf %73, %76 : vector<8x8xf32>
    %78 = math.exp %77 : vector<8x8xf32>
    %cst_40 = arith.constant dense<0.000000e+00> : vector<8xf32>
    %79 = vector.multi_reduction <add>, %78, %cst_40 [1] : vector<8x8xf32> to vector<8xf32>
    %80 = vector.shape_cast %79 : vector<8xf32> to vector<8x1xf32>
    %81 = tpu.reciprocal %80 {approx = true} : vector<8x1xf32> -> vector<8x1xf32>
    %82 = arith.truncf %78 : vector<8x8xf32> to vector<8x8xbf16>
    %cst_41 = arith.constant dense<0.000000e+00> : vector<8x8xf32>
    %83 = tpu.matmul %82, %71, %cst_41 {dimension_numbers = #tpu.dot_dimension_numbers<[1], [0], [0], [1], [0, 0, 1, 1], [], []>} : vector<8x8xbf16>, vector<8x8xbf16>, vector<8x8xf32> -> vector<8x8xf32>
    %84 = vector.broadcast %81 : vector<8x1xf32> to vector<8x8xf32>
    %85 = arith.mulf %83, %84 : vector<8x8xf32>
    %86 = arith.truncf %85 : vector<8x8xf32> to vector<8x8xbf16>
    %c0_42 = arith.constant 0 : index
    %c16 = arith.constant 16 : index
    %87 = vector.load %arg13[%c0_42, %c16] : memref<8x32xbf16, #tpu.memory_space<vmem>>, vector<8x8xbf16>
    tpu.vector_store %arg13[%c0_42, %c16], %86 {strides = array<i32>} : memref<8x32xbf16, #tpu.memory_space<vmem>>, vector<8x8xbf16>,
    %88 = vector.extract_strided_slice %16 {offsets = [0, 24], sizes = [8, 8], strides = [1, 1]} : vector<8x32xbf16> to vector<8x8xbf16>
    %c3 = arith.constant 3 : index
    %c0_43 = arith.constant 0 : index
    %c0_44 = arith.constant 0 : index
    %89 = vector.load %arg14[%c3, %c0_43, %c0_44] : memref<4x8x8xbf16, #tpu.memory_space<vmem>>, vector<1x8x8xbf16>
    %90 = vector.shape_cast %89 : vector<1x8x8xbf16> to vector<8x8xbf16>
    %c3_45 = arith.constant 3 : index
    %c0_46 = arith.constant 0 : index
    %c0_47 = arith.constant 0 : index
    %91 = vector.load %arg15[%c3_45, %c0_46, %c0_47] : memref<4x8x8xbf16, #tpu.memory_space<vmem>>, vector<1x8x8xbf16>
    %92 = vector.shape_cast %91 : vector<1x8x8xbf16> to vector<8x8xbf16>
    %cst_48 = arith.constant dense<0.000000e+00> : vector<8x8xf32>
    %93 = tpu.matmul %88, %90, %cst_48 {dimension_numbers = #tpu.dot_dimension_numbers<[1], [1], [0], [0], [0, 0, 1, 0], [], []>} : vector<8x8xbf16>, vector<8x8xbf16>, vector<8x8xf32> -> vector<8x8xf32>
    %94 = arith.addf %93, %24 : vector<8x8xf32>
    %cst_49 = arith.constant dense<0xFF800000> : vector<8xf32>
    %95 = vector.multi_reduction <maximumf>, %94, %cst_49 [1] : vector<8x8xf32> to vector<8xf32>
    %96 = vector.shape_cast %95 : vector<8xf32> to vector<8x1xf32>
    %97 = vector.broadcast %96 : vector<8x1xf32> to vector<8x8xf32>
    %98 = arith.subf %94, %97 : vector<8x8xf32>
    %99 = math.exp %98 : vector<8x8xf32>
    %cst_50 = arith.constant dense<0.000000e+00> : vector<8xf32>
    %100 = vector.multi_reduction <add>, %99, %cst_50 [1] : vector<8x8xf32> to vector<8xf32>
    %101 = vector.shape_cast %100 : vector<8xf32> to vector<8x1xf32>
    %102 = tpu.reciprocal %101 {approx = true} : vector<8x1xf32> -> vector<8x1xf32>
    %103 = arith.truncf %99 : vector<8x8xf32> to vector<8x8xbf16>
    %cst_51 = arith.constant dense<0.000000e+00> : vector<8x8xf32>
    %104 = tpu.matmul %103, %92, %cst_51 {dimension_numbers = #tpu.dot_dimension_numbers<[1], [0], [0], [1], [0, 0, 1, 1], [], []>} : vector<8x8xbf16>, vector<8x8xbf16>, vector<8x8xf32> -> vector<8x8xf32>
    %105 = vector.broadcast %102 : vector<8x1xf32> to vector<8x8xf32>
    %106 = arith.mulf %104, %105 : vector<8x8xf32>
    %107 = arith.truncf %106 : vector<8x8xf32> to vector<8x8xbf16>
    %c0_52 = arith.constant 0 : index
    %c24 = arith.constant 24 : index
    %108 = vector.load %arg13[%c0_52, %c24] : memref<8x32xbf16, #tpu.memory_space<vmem>>, vector<8x8xbf16>
    tpu.vector_store %arg13[%c0_52, %c24], %107 {strides = array<i32>} : memref<8x32xbf16, #tpu.memory_space<vmem>>, vector<8x8xbf16>,
    %c0_53 = arith.constant 0 : index
    %c0_54 = arith.constant 0 : index
    %109 = vector.load %arg13[%c0_53, %c0_54] : memref<8x32xbf16, #tpu.memory_space<vmem>>, vector<8x32xbf16>
    %c0_55 = arith.constant 0 : index
    %c0_56 = arith.constant 0 : index
    %110 = vector.load %arg8[%c0_55, %c0_56] : memref<32x32xbf16, #tpu.memory_space<vmem>>, vector<32x32xbf16>
    %cst_57 = arith.constant dense<0.000000e+00> : vector<8x32xf32>
    %111 = tpu.matmul %109, %110, %cst_57 {dimension_numbers = #tpu.dot_dimension_numbers<[1], [0], [0], [1], [0, 0, 1, 1], [], []>} : vector<8x32xbf16>, vector<32x32xbf16>, vector<8x32xf32> -> vector<8x32xf32>
    %c0_58 = arith.constant 0 : index
    %c0_59 = arith.constant 0 : index
    %112 = vector.load %arg9[%c0_58, %c0_59] : memref<1x32xf32, #tpu.memory_space<vmem>>, vector<1x32xf32>
    %113 = vector.shape_cast %112 : vector<1x32xf32> to vector<32xf32>
    %114 = vector.shape_cast %113 : vector<32xf32> to vector<1x32xf32>
    %115 = vector.broadcast %114 : vector<1x32xf32> to vector<8x32xf32>
    %116 = arith.addf %111, %115 : vector<8x32xf32>
    %117 = arith.addf %116, %7 : vector<8x32xf32>
    %cst_60 = arith.constant dense<0.000000e+00> : vector<8xf32>
    %118 = vector.multi_reduction <add>, %117, %cst_60 [1] : vector<8x32xf32> to vector<8xf32>
    %119 = vector.shape_cast %118 : vector<8xf32> to vector<8x1xf32>
    %cst_61 = arith.constant 3.200000e+01 : f32
    %120 = vector.broadcast %cst_61 : f32 to vector<8x1xf32>
    %121 = arith.divf %119, %120 : vector<8x1xf32>
    %122 = vector.broadcast %121 : vector<8x1xf32> to vector<8x32xf32>
    %123 = arith.subf %117, %122 : vector<8x32xf32>
    %124 = arith.mulf %123, %123 : vector<8x32xf32>
    %cst_62 = arith.constant dense<0.000000e+00> : vector<8xf32>
    %125 = vector.multi_reduction <add>, %124, %cst_62 [1] : vector<8x32xf32> to vector<8xf32>
    %126 = vector.shape_cast %125 : vector<8xf32> to vector<8x1xf32>
    %cst_63 = arith.constant 3.200000e+01 : f32
    %127 = vector.broadcast %cst_63 : f32 to vector<8x1xf32>
    %128 = arith.divf %126, %127 : vector<8x1xf32>
    %129 = vector.broadcast %121 : vector<8x1xf32> to vector<8x32xf32>
    %130 = arith.subf %117, %129 : vector<8x32xf32>
    %cst_64 = arith.constant 9.99999996E-13 : f32
    %131 = vector.broadcast %cst_64 : f32 to vector<8x1xf32>
    %132 = arith.addf %128, %131 : vector<8x1xf32>
    %133 = math.rsqrt %132 : vector<8x1xf32>
    %134 = vector.broadcast %133 : vector<8x1xf32> to vector<8x32xf32>
    %135 = arith.mulf %130, %134 : vector<8x32xf32>
    %c0_65 = arith.constant 0 : index
    %c0_66 = arith.constant 0 : index
    %136 = vector.load %arg10[%c0_65, %c0_66] : memref<1x32xf32, #tpu.memory_space<vmem>>, vector<1x32xf32>
    %137 = vector.shape_cast %136 : vector<1x32xf32> to vector<32xf32>
    %138 = vector.shape_cast %137 : vector<32xf32> to vector<1x32xf32>
    %139 = vector.broadcast %138 : vector<1x32xf32> to vector<8x32xf32>
    %140 = arith.mulf %135, %139 : vector<8x32xf32>
    %c0_67 = arith.constant 0 : index
    %c0_68 = arith.constant 0 : index
    %141 = vector.load %arg11[%c0_67, %c0_68] : memref<1x32xf32, #tpu.memory_space<vmem>>, vector<1x32xf32>
    %142 = vector.shape_cast %141 : vector<1x32xf32> to vector<32xf32>
    %143 = vector.shape_cast %142 : vector<32xf32> to vector<1x32xf32>
    %144 = vector.broadcast %143 : vector<1x32xf32> to vector<8x32xf32>
    %145 = arith.addf %140, %144 : vector<8x32xf32>
    %c0_69 = arith.constant 0 : index
    %c0_70 = arith.constant 0 : index
    %c0_71 = arith.constant 0 : index
    %146 = vector.load %arg12[%c0_69, %c0_70, %c0_71] : memref<1x8x32xf32, #tpu.memory_space<vmem>>, vector<1x8x32xf32>
    %147 = vector.shape_cast %146 : vector<1x8x32xf32> to vector<8x32xf32>
    %148 = vector.shape_cast %145 : vector<8x32xf32> to vector<1x8x32xf32>
    tpu.vector_store %arg12[%c0_69, %c0_70, %c0_71], %148 {strides = array<i32>} : memref<1x8x32xf32, #tpu.memory_space<vmem>>, vector<1x8x32xf32>,
    return
  }
  func.func @transform_0(%arg0: i32, %arg1: i32) -> (i32, i32, i32) {
    %c0_i32 = arith.constant 0 : i32
    %c0_i32_0 = arith.constant 0 : i32
    %c0_i32_1 = arith.constant 0 : i32
    return %arg0, %c0_i32, %c0_i32_0 : i32, i32, i32
  }
  func.func @transform_1(%arg0: i32, %arg1: i32) -> (i32, i32, i32) {
    %c0_i32 = arith.constant 0 : i32
    %c0_i32_0 = arith.constant 0 : i32
    %c0_i32_1 = arith.constant 0 : i32
    return %arg0, %c0_i32, %c0_i32_0 : i32, i32, i32
  }
  func.func @transform_2(%arg0: i32, %arg1: i32) -> (i32, i32) {
    %c0_i32 = arith.constant 0 : i32
    %c0_i32_0 = arith.constant 0 : i32
    %c0_i32_1 = arith.constant 0 : i32
    return %c0_i32, %c0_i32_0 : i32, i32
  }
  func.func @transform_3(%arg0: i32, %arg1: i32) -> (i32, i32) {
    %c0_i32 = arith.constant 0 : i32
    %c0_i32_0 = arith.constant 0 : i32
    %c0_i32_1 = arith.constant 0 : i32
    return %c0_i32, %c0_i32_0 : i32, i32
  }
  func.func @transform_4(%arg0: i32, %arg1: i32) -> (i32, i32) {
    %c0_i32 = arith.constant 0 : i32
    %c0_i32_0 = arith.constant 0 : i32
    %c0_i32_1 = arith.constant 0 : i32
    return %c0_i32, %c0_i32_0 : i32, i32
  }
  func.func @transform_5(%arg0: i32, %arg1: i32) -> (i32, i32) {
    %c0_i32 = arith.constant 0 : i32
    %c0_i32_0 = arith.constant 0 : i32
    %c0_i32_1 = arith.constant 0 : i32
    return %c0_i32, %c0_i32_0 : i32, i32
  }
  func.func @transform_6(%arg0: i32, %arg1: i32) -> (i32, i32) {
    %c0_i32 = arith.constant 0 : i32
    %c0_i32_0 = arith.constant 0 : i32
    %c0_i32_1 = arith.constant 0 : i32
    return %c0_i32, %c0_i32_0 : i32, i32
  }
  func.func @transform_7(%arg0: i32, %arg1: i32) -> (i32, i32) {
    %c0_i32 = arith.constant 0 : i32
    %c0_i32_0 = arith.constant 0 : i32
    %c0_i32_1 = arith.constant 0 : i32
    return %c0_i32, %c0_i32_0 : i32, i32
  }
  func.func @transform_8(%arg0: i32, %arg1: i32) -> (i32, i32) {
    %c0_i32 = arith.constant 0 : i32
    %c0_i32_0 = arith.constant 0 : i32
    %c0_i32_1 = arith.constant 0 : i32
    return %c0_i32, %c0_i32_0 : i32, i32
  }
  func.func @transform_9(%arg0: i32, %arg1: i32) -> (i32, i32) {
    %c0_i32 = arith.constant 0 : i32
    %c0_i32_0 = arith.constant 0 : i32
    %c0_i32_1 = arith.constant 0 : i32
    return %c0_i32, %c0_i32_0 : i32, i32
  }
  func.func @transform_10(%arg0: i32, %arg1: i32) -> (i32, i32, i32) {
    %c0_i32 = arith.constant 0 : i32
    %c0_i32_0 = arith.constant 0 : i32
    return %arg0, %arg1, %c0_i32 : i32, i32, i32
  }
}

</mosaic_0001>

<llo_original>
// kernel: tpu_custom_call.1
$region0: #{tpu_custom_call.1}
  #allocation0 [shape = 'u32[]', space=smem, size = 0x4, offset = 0x4, fixed_abs, tag = 'smem constant byte address 0x4 - core index']
  #allocation1 [shape = 'u32[72,128]{1,0:T(1,128)}', space=vmem, size = 0x9000, scoped, tag = 'internal scratch']
  #allocation2 [shape = 'bf16[8,32]{1,0:T(8,128)(2,1)}', space=vmem, size = 0x800, scoped, tag = 'scratch operand']
  #allocation3 [shape = 'bf16[4,8,8]{2,1,0:T(8,128)(2,1)}', space=vmem, size = 0x2000, scoped, tag = 'scratch operand']
  #allocation4 [shape = 'bf16[4,8,8]{2,1,0:T(8,128)(2,1)}', space=vmem, size = 0x2000, scoped, tag = 'scratch operand']
  %s0 = inlined_call_operand.hbm [shape: f32[2,8,32], index: 0, kind: input, shape index: {}]
  %s1 = inlined_call_operand.hbm [shape: f32[2,1,8], index: 1, kind: input, shape index: {}]
  %s2 = inlined_call_operand.hbm [shape: bf16[32,32], index: 2, kind: input, shape index: {}]
  %s3 = inlined_call_operand.vmem [shape: f32[1,32], index: 3, kind: input, shape index: {}]
  %s4 = inlined_call_operand.hbm [shape: bf16[32,64], index: 4, kind: input, shape index: {}]
  %s5 = inlined_call_operand.vmem [shape: f32[1,64], index: 5, kind: input, shape index: {}]
  %s6 = inlined_call_operand.hbm [shape: bf16[32,32], index: 6, kind: input, shape index: {}]
  %s7 = inlined_call_operand.vmem [shape: f32[1,32], index: 7, kind: input, shape index: {}]
  %s8 = inlined_call_operand.vmem [shape: f32[1,32], index: 8, kind: input, shape index: {}]
  %s9 = inlined_call_operand.vmem [shape: f32[1,32], index: 9, kind: input, shape index: {}]
  %s10 = inlined_call_operand.hbm [shape: f32[2,8,32], index: 10, kind: output, shape index: {}]
  %s11 = sld [smem:[#allocation0]]
  $region97: #{tpu_custom_call.1} parent=0
    _
  %s13 = ssub.s32 1, %s11
  %s14 = scalar_select 0, %s13, %s11
  $region1: #{tpu_custom_call.1} parent=0
    #allocation5 [shape = 'u8[8192]{0}', space=vmem, size = 0x2000, scoped, tag = 'input window, operand 0']
    #allocation6 [shape = 's32[2]{0}', space=sflag, size = 0x8, scoped, tag = 'scoped memory for tpu_custom_call.1']
    #allocation7 [shape = 's32[2]{0}', space=sflag, size = 0x8, scoped, tag = 'scoped memory for tpu_custom_call.1']
    #allocation8 [shape = 'u8[1024]{0}', space=vmem, size = 0x400, scoped, tag = 'input window, operand 1']
    #allocation9 [shape = 's32[2]{0}', space=sflag, size = 0x8, scoped, tag = 'scoped memory for tpu_custom_call.1']
    #allocation10 [shape = 'u8[8192]{0}', space=vmem, size = 0x2000, scoped, tag = 'input window, operand 2, single buffered']
    #allocation11 [shape = 'u8[8192]{0}', space=vmem, size = 0x2000, scoped, tag = 'input window, operand 4, single buffered']
    #allocation12 [shape = 's32[1]{0}', space=sflag, size = 0x4, scoped, tag = 'scoped memory for tpu_custom_call.1']
    #allocation13 [shape = 'u8[8192]{0}', space=vmem, size = 0x2000, scoped, tag = 'input window, operand 6, single buffered']
    #allocation14 [shape = 'u8[8192]{0}', space=vmem, size = 0x2000, scoped, tag = 'output window, operand 0']
    %15 = vsyncpa [#allocation6], 0
    %s16 = scalar_lea.sflag [#allocation6], 1
    %17 = vsyncpa %s16, 0
    %18 = vsyncpa [#allocation9], 0
    %s19 = scalar_lea.sflag [#allocation9], 1
    %20 = vsyncpa %s19, 0
    %21 = vsyncpa [#allocation12], 0
    %22 = vsyncpa [#allocation7], 0
    %s23 = scalar_lea.sflag [#allocation7], 1
    %24 = vsyncpa %s23, 0
    loop: start=0, step=1, limit=4
    $region2: #{tpu_custom_call.1} parent=1 // loop_pre_header
      _
    $region3: #{tpu_custom_call.1} parent=1 // loop_header
      %s26 = sphi 0, %s30
      %p27 = scmp.ge.s32.totalorder %s26, 4
      %s33 = sphi 0, %s45
      %s34 = sphi 0, %s41
      %s35 = sphi 0, %s33
      %s36 = sphi 0, %s34
      %s37 = sphi 0, %s35
      %s38 = sphi 0, %s36
      %s48 = sphi 0, %s50
      %s51 = sphi 0, %s48
      %s52 = sphi 0, %s51
      %s68 = sphi 0, %s52
      %s74 = sphi 0, %s76
      %s77 = sphi 0, %s74
      %s78 = sphi 0, %s77
      %s94 = sphi 0, %s78
      %s98 = sphi 0, %s98
      %s100 = sphi 0, %s98
      %s101 = sphi 0, %s100
      %s115 = sphi 0, %s101
      %s119 = sphi 0, %s119
      %s121 = sphi 0, %s119
      %s122 = sphi 0, %s121
      %s136 = sphi 0, %s122
      %s140 = sphi 0, %s140
      %s142 = sphi 0, %s140
      %s143 = sphi 0, %s142
      %s157 = sphi 0, %s143
      %s161 = sphi 0, %s161
      %s163 = sphi 0, %s161
      %s164 = sphi 0, %s163
      %s178 = sphi 0, %s164
      %s182 = sphi 0, %s182
      %s184 = sphi 0, %s182
      %s185 = sphi 0, %s184
      %s199 = sphi 0, %s185
      %s203 = sphi 0, %s203
      %s205 = sphi 0, %s203
      %s206 = sphi 0, %s205
      %s220 = sphi 0, %s206
      %s224 = sphi 0, %s224
      %s226 = sphi 0, %s224
      %s227 = sphi 0, %s226
      %s241 = sphi 0, %s227
      %s245 = sphi 0, %s245
      %s247 = sphi 0, %s245
      %s248 = sphi 0, %s247
      %s262 = sphi 0, %s248
      %s270 = sphi 0, %s272
      %s273 = sphi 0, %s270
      %s274 = sphi 0, %s273
      %s290 = sphi 0, %s274
    $region4: #{tpu_custom_call.1} parent=1 // loop_header_branch
      %29 = sbr.rel (%p27) target = $region8
    $region5: #{tpu_custom_call.1} parent=1 // loop_body
      %s31 = ssub.s32 %s26, 1
      %s32 = ssub.s32 %s26, 2
      %s39 = sadd.s32 1, %s34
      %p40 = scmp.ge.s32.totalorder %s39, 1
      %s41 = scalar_select %p40, 0, %s39
      %s42 = sadd.s32 1, %s33
      %s43 = scalar_select %p40, %s42, %s33
      %p44 = scmp.ge.s32.totalorder %s43, 2
      %s45 = scalar_select %p44, 0, %s43
      %s46 = ssub.s32 %s33, %s45
      %p47 = scmp.eq.s32.totalorder %s46, 0
      %s49 = sadd.s32 %s48, 1
      %s50 = scalar_select %p47, %s48, %s49
      %p53 = pneg %p47
      %p54 = scmp.eq.s32.totalorder %s26, 1
      %p55 = por %p53, %p54
      %p56 = scmp.ne.s32.totalorder %s48, %s51
      %p57 = scmp.eq.s32.totalorder %s26, 0
      %p58 = por %p56, %p57
      %p59 = scmp.ne.s32.totalorder %s48, %s51
      %p60 = scmp.eq.s32.totalorder %s31, 1
      %p61 = por %p59, %p60
      %p62 = scmp.ne.s32.totalorder %s51, %s52
      %p63 = scmp.eq.s32.totalorder %s31, 0
      %p64 = por %p62, %p63
      %p65 = scmp.ne.s32.totalorder %s51, %s52
      %p66 = scmp.eq.s32.totalorder %s32, 1
      %p67 = por %p65, %p66
      %p69 = scmp.ne.s32.totalorder %s52, %s68
      %p70 = scmp.eq.s32.totalorder %s32, 0
      %p71 = por %p69, %p70
      %s72 = ssub.s32 %s33, %s45
      %p73 = scmp.eq.s32.totalorder %s72, 0
      %s75 = sadd.s32 %s74, 1
      %s76 = scalar_select %p73, %s74, %s75
      %p79 = pneg %p73
      %p80 = scmp.eq.s32.totalorder %s26, 1
      %p81 = por %p79, %p80
      %p82 = scmp.ne.s32.totalorder %s74, %s77
      %p83 = scmp.eq.s32.totalorder %s26, 0
      %p84 = por %p82, %p83
      %p85 = scmp.ne.s32.totalorder %s74, %s77
      %p86 = scmp.eq.s32.totalorder %s31, 1
      %p87 = por %p85, %p86
      %p88 = scmp.ne.s32.totalorder %s77, %s78
      %p89 = scmp.eq.s32.totalorder %s31, 0
      %p90 = por %p88, %p89
      %p91 = scmp.ne.s32.totalorder %s77, %s78
      %p92 = scmp.eq.s32.totalorder %s32, 1
      %p93 = por %p91, %p92
      %p95 = scmp.ne.s32.totalorder %s78, %s94
      %p96 = scmp.eq.s32.totalorder %s32, 0
      %p97 = por %p95, %p96
      %s99 = sadd.s32 %s98, 1
      %p102 = scmp.eq.s32.totalorder %s26, 1
      %p103 = scmp.ne.s32.totalorder %s98, %s100
      %p104 = scmp.eq.s32.totalorder %s26, 0
      %p105 = por %p103, %p104
      %p106 = scmp.ne.s32.totalorder %s98, %s100
      %p107 = scmp.eq.s32.totalorder %s31, 1
      %p108 = por %p106, %p107
      %p109 = scmp.ne.s32.totalorder %s100, %s101
      %p110 = scmp.eq.s32.totalorder %s31, 0
      %p111 = por %p109, %p110
      %p112 = scmp.ne.s32.totalorder %s100, %s101
      %p113 = scmp.eq.s32.totalorder %s32, 1
      %p114 = por %p112, %p113
      %p116 = scmp.ne.s32.totalorder %s101, %s115
      %p117 = scmp.eq.s32.totalorder %s32, 0
      %p118 = por %p116, %p117
      %s120 = sadd.s32 %s119, 1
      %p123 = scmp.eq.s32.totalorder %s26, 1
      %p124 = scmp.ne.s32.totalorder %s119, %s121
      %p125 = scmp.eq.s32.totalorder %s26, 0
      %p126 = por %p124, %p125
      %p127 = scmp.ne.s32.totalorder %s119, %s121
      %p128 = scmp.eq.s32.totalorder %s31, 1
      %p129 = por %p127, %p128
      %p130 = scmp.ne.s32.totalorder %s121, %s122
      %p131 = scmp.eq.s32.totalorder %s31, 0
      %p132 = por %p130, %p131
      %p133 = scmp.ne.s32.totalorder %s121, %s122
      %p134 = scmp.eq.s32.totalorder %s32, 1
      %p135 = por %p133, %p134
      %p137 = scmp.ne.s32.totalorder %s122, %s136
      %p138 = scmp.eq.s32.totalorder %s32, 0
      %p139 = por %p137, %p138
      %s141 = sadd.s32 %s140, 1
      %p144 = scmp.eq.s32.totalorder %s26, 1
      %p145 = scmp.ne.s32.totalorder %s140, %s142
      %p146 = scmp.eq.s32.totalorder %s26, 0
      %p147 = por %p145, %p146
      %p148 = scmp.ne.s32.totalorder %s140, %s142
      %p149 = scmp.eq.s32.totalorder %s31, 1
      %p150 = por %p148, %p149
      %p151 = scmp.ne.s32.totalorder %s142, %s143
      %p152 = scmp.eq.s32.totalorder %s31, 0
      %p153 = por %p151, %p152
      %p154 = scmp.ne.s32.totalorder %s142, %s143
      %p155 = scmp.eq.s32.totalorder %s32, 1
      %p156 = por %p154, %p155
      %p158 = scmp.ne.s32.totalorder %s143, %s157
      %p159 = scmp.eq.s32.totalorder %s32, 0
      %p160 = por %p158, %p159
      %s162 = sadd.s32 %s161, 1
      %p165 = scmp.eq.s32.totalorder %s26, 1
      %p166 = scmp.ne.s32.totalorder %s161, %s163
      %p167 = scmp.eq.s32.totalorder %s26, 0
      %p168 = por %p166, %p167
      %p169 = scmp.ne.s32.totalorder %s161, %s163
      %p170 = scmp.eq.s32.totalorder %s31, 1
      %p171 = por %p169, %p170
      %p172 = scmp.ne.s32.totalorder %s163, %s164
      %p173 = scmp.eq.s32.totalorder %s31, 0
      %p174 = por %p172, %p173
      %p175 = scmp.ne.s32.totalorder %s163, %s164
      %p176 = scmp.eq.s32.totalorder %s32, 1
      %p177 = por %p175, %p176
      %p179 = scmp.ne.s32.totalorder %s164, %s178
      %p180 = scmp.eq.s32.totalorder %s32, 0
      %p181 = por %p179, %p180
      %s183 = sadd.s32 %s182, 1
      %p186 = scmp.eq.s32.totalorder %s26, 1
      %p187 = scmp.ne.s32.totalorder %s182, %s184
      %p188 = scmp.eq.s32.totalorder %s26, 0
      %p189 = por %p187, %p188
      %p190 = scmp.ne.s32.totalorder %s182, %s184
      %p191 = scmp.eq.s32.totalorder %s31, 1
      %p192 = por %p190, %p191
      %p193 = scmp.ne.s32.totalorder %s184, %s185
      %p194 = scmp.eq.s32.totalorder %s31, 0
      %p195 = por %p193, %p194
      %p196 = scmp.ne.s32.totalorder %s184, %s185
      %p197 = scmp.eq.s32.totalorder %s32, 1
      %p198 = por %p196, %p197
      %p200 = scmp.ne.s32.totalorder %s185, %s199
      %p201 = scmp.eq.s32.totalorder %s32, 0
      %p202 = por %p200, %p201
      %s204 = sadd.s32 %s203, 1
      %p207 = scmp.eq.s32.totalorder %s26, 1
      %p208 = scmp.ne.s32.totalorder %s203, %s205
      %p209 = scmp.eq.s32.totalorder %s26, 0
      %p210 = por %p208, %p209
      %p211 = scmp.ne.s32.totalorder %s203, %s205
      %p212 = scmp.eq.s32.totalorder %s31, 1
      %p213 = por %p211, %p212
      %p214 = scmp.ne.s32.totalorder %s205, %s206
      %p215 = scmp.eq.s32.totalorder %s31, 0
      %p216 = por %p214, %p215
      %p217 = scmp.ne.s32.totalorder %s205, %s206
      %p218 = scmp.eq.s32.totalorder %s32, 1
      %p219 = por %p217, %p218
      %p221 = scmp.ne.s32.totalorder %s206, %s220
      %p222 = scmp.eq.s32.totalorder %s32, 0
      %p223 = por %p221, %p222
      %s225 = sadd.s32 %s224, 1
      %p228 = scmp.eq.s32.totalorder %s26, 1
      %p229 = scmp.ne.s32.totalorder %s224, %s226
      %p230 = scmp.eq.s32.totalorder %s26, 0
      %p231 = por %p229, %p230
      %p232 = scmp.ne.s32.totalorder %s224, %s226
      %p233 = scmp.eq.s32.totalorder %s31, 1
      %p234 = por %p232, %p233
      %p235 = scmp.ne.s32.totalorder %s226, %s227
      %p236 = scmp.eq.s32.totalorder %s31, 0
      %p237 = por %p235, %p236
      %p238 = scmp.ne.s32.totalorder %s226, %s227
      %p239 = scmp.eq.s32.totalorder %s32, 1
      %p240 = por %p238, %p239
      %p242 = scmp.ne.s32.totalorder %s227, %s241
      %p243 = scmp.eq.s32.totalorder %s32, 0
      %p244 = por %p242, %p243
      %s246 = sadd.s32 %s245, 1
      %p249 = scmp.eq.s32.totalorder %s26, 1
      %p250 = scmp.ne.s32.totalorder %s245, %s247
      %p251 = scmp.eq.s32.totalorder %s26, 0
      %p252 = por %p250, %p251
      %p253 = scmp.ne.s32.totalorder %s245, %s247
      %p254 = scmp.eq.s32.totalorder %s31, 1
      %p255 = por %p253, %p254
      %p256 = scmp.ne.s32.totalorder %s247, %s248
      %p257 = scmp.eq.s32.totalorder %s31, 0
      %p258 = por %p256, %p257
      %p259 = scmp.ne.s32.totalorder %s247, %s248
      %p260 = scmp.eq.s32.totalorder %s32, 1
      %p261 = por %p259, %p260
      %p263 = scmp.ne.s32.totalorder %s248, %s262
      %p264 = scmp.eq.s32.totalorder %s32, 0
      %p265 = por %p263, %p264
      %s266 = ssub.s32 %s33, %s45
      %s267 = ssub.s32 %s34, %s41
      %s268 = sor.u32 %s266, %s267
      %p269 = scmp.eq.s32.totalorder %s268, 0
      %s271 = sadd.s32 %s270, 1
      %s272 = scalar_select %p269, %s270, %s271
      %p275 = pneg %p269
      %p276 = scmp.eq.s32.totalorder %s26, 1
      %p277 = por %p275, %p276
      %p278 = scmp.ne.s32.totalorder %s270, %s273
      %p279 = scmp.eq.s32.totalorder %s26, 0
      %p280 = por %p278, %p279
      %p281 = scmp.ne.s32.totalorder %s270, %s273
      %p282 = scmp.eq.s32.totalorder %s31, 1
      %p283 = por %p281, %p282
      %p284 = scmp.ne.s32.totalorder %s273, %s274
      %p285 = scmp.eq.s32.totalorder %s31, 0
      %p286 = por %p284, %p285
      %p287 = scmp.ne.s32.totalorder %s273, %s274
      %p288 = scmp.eq.s32.totalorder %s32, 1
      %p289 = por %p287, %p288
      %p291 = scmp.ne.s32.totalorder %s274, %s290
      %p292 = scmp.eq.s32.totalorder %s32, 0
      %p293 = por %p291, %p292
      %p294 = scmp.le.s32.totalorder 1, %s26
      %p295 = scmp.lt.s32.totalorder %s26, 3
      %p296 = pnand %p294, %p295
      %p297 = pneg %p296
      // Predicated region
      $region9: #{tpu_custom_call.1} parent=5 // pred_check
        _
      $region10: #{tpu_custom_call.1} parent=5 // pred_check_branch
        %299 = sbr.rel (%p296) target = $region12
      $region11: #{tpu_custom_call.1} parent=5 // pred_region
        %s300 = ssub.s32 %s26, 1
        // Predicated region
        $region13: #{tpu_custom_call.1} parent=11 // pred_check
          %p301 = pneg %p111
        $region14: #{tpu_custom_call.1} parent=11 // pred_check_branch
          %303 = sbr.rel (%p301) target = $region16
        $region15: #{tpu_custom_call.1} parent=11 // pred_region
          %305 = vsyncadd [#allocation9], 0
          %s306 = sshll.u32 %s2, 4
          %s307 = int_to_ptr.hbm [resolvable:$true] %s306
          %s308 = sshll.u32 [#allocation10], 4
          %s309 = int_to_ptr.vmem [resolvable:$true] %s308
          %314 = dma.hbm_to_vmem [thread:$0]  %s307, 256, %s309, [#allocation9], 64, 64, 4
        $region16: #{tpu_custom_call.1} parent=11 // pred_fallthru
          _
        // Predicated region
        $region17: #{tpu_custom_call.1} parent=11 // pred_check
          %p315 = pneg %p132
        $region18: #{tpu_custom_call.1} parent=11 // pred_check_branch
          %317 = sbr.rel (%p315) target = $region20
        $region19: #{tpu_custom_call.1} parent=11 // pred_region
          _
        $region20: #{tpu_custom_call.1} parent=11 // pred_fallthru
          _
        // Predicated region
        $region21: #{tpu_custom_call.1} parent=11 // pred_check
          %p318 = pneg %p153
        $region22: #{tpu_custom_call.1} parent=11 // pred_check_branch
          %320 = sbr.rel (%p318) target = $region24
        $region23: #{tpu_custom_call.1} parent=11 // pred_region
          %322 = vsyncadd [#allocation12], 0
          %s323 = sshll.u32 %s4, 4
          %s324 = int_to_ptr.hbm [resolvable:$true] %s323
          %s325 = sshll.u32 [#allocation11], 4
          %s326 = int_to_ptr.vmem [resolvable:$true] %s325
          %331 = dma.hbm_to_vmem [thread:$0]  %s324, 256, %s326, [#allocation12], 64, 64, 4
        $region24: #{tpu_custom_call.1} parent=11 // pred_fallthru
          _
        // Predicated region
        $region25: #{tpu_custom_call.1} parent=11 // pred_check
          %p332 = pneg %p174
        $region26: #{tpu_custom_call.1} parent=11 // pred_check_branch
          %334 = sbr.rel (%p332) target = $region28
        $region27: #{tpu_custom_call.1} parent=11 // pred_region
          _
        $region28: #{tpu_custom_call.1} parent=11 // pred_fallthru
          _
        // Predicated region
        $region29: #{tpu_custom_call.1} parent=11 // pred_check
          %p335 = pneg %p195
        $region30: #{tpu_custom_call.1} parent=11 // pred_check_branch
          %337 = sbr.rel (%p335) target = $region32
        $region31: #{tpu_custom_call.1} parent=11 // pred_region
          %339 = vsyncadd [#allocation12], 0
          %s340 = sshll.u32 %s6, 4
          %s341 = int_to_ptr.hbm [resolvable:$true] %s340
          %s342 = sshll.u32 [#allocation13], 4
          %s343 = int_to_ptr.vmem [resolvable:$true] %s342
          %348 = dma.hbm_to_vmem [thread:$0]  %s341, 256, %s343, [#allocation12], 64, 64, 4
        $region32: #{tpu_custom_call.1} parent=11 // pred_fallthru
          _
        // Predicated region
        $region33: #{tpu_custom_call.1} parent=11 // pred_check
          %p349 = pneg %p216
        $region34: #{tpu_custom_call.1} parent=11 // pred_check_branch
          %351 = sbr.rel (%p349) target = $region36
        $region35: #{tpu_custom_call.1} parent=11 // pred_region
          _
        $region36: #{tpu_custom_call.1} parent=11 // pred_fallthru
          _
        // Predicated region
        $region37: #{tpu_custom_call.1} parent=11 // pred_check
          %p352 = pneg %p237
        $region38: #{tpu_custom_call.1} parent=11 // pred_check_branch
          %354 = sbr.rel (%p352) target = $region40
        $region39: #{tpu_custom_call.1} parent=11 // pred_region
          _
        $region40: #{tpu_custom_call.1} parent=11 // pred_fallthru
          _
        // Predicated region
        $region41: #{tpu_custom_call.1} parent=11 // pred_check
          %p355 = pneg %p258
        $region42: #{tpu_custom_call.1} parent=11 // pred_check_branch
          %357 = sbr.rel (%p355) target = $region44
        $region43: #{tpu_custom_call.1} parent=11 // pred_region
          _
        $region44: #{tpu_custom_call.1} parent=11 // pred_fallthru
          _
      $region12: #{tpu_custom_call.1} parent=5 // pred_fallthru
        _
      %p358 = scmp.lt.s32.totalorder %s26, 2
      // Predicated region
      $region45: #{tpu_custom_call.1} parent=5 // pred_check
        %p359 = pneg %p358
      $region46: #{tpu_custom_call.1} parent=5 // pred_check_branch
        %361 = sbr.rel (%p359) target = $region48
      $region47: #{tpu_custom_call.1} parent=5 // pred_region
        // Predicated region
        $region49: #{tpu_custom_call.1} parent=47 // pred_check
          %p362 = pneg %p58
        $region50: #{tpu_custom_call.1} parent=47 // pred_check_branch
          %364 = sbr.rel (%p362) target = $region52
        $region51: #{tpu_custom_call.1} parent=47 // pred_region
          %s365 = sand.u32 %s48, 1
          %s366 = scalar_lea.sflag [#allocation6], %s365
          %s367 = sand.u32 %s48, 1
          %s368 = smul.addr %s367, 8
          %s369 = scalar_lea.vmem [#allocation5], %s368
          %371 = vsyncadd %s366, 0
          %s372 = smul.addr %s33, 8
          %s373 = scalar_lea.hbm %s0, %s372
          %s375 = sshll.u32 %s373, 4
          %s376 = int_to_ptr.hbm [resolvable:$true] %s375
          %s377 = sshll.u32 %s369, 4
          %s378 = int_to_ptr.vmem [resolvable:$true] %s377
          %380 = dma.hbm_to_vmem [thread:$0]  %s376, 128, %s378, %s366
        $region52: #{tpu_custom_call.1} parent=47 // pred_fallthru
          _
        // Predicated region
        $region53: #{tpu_custom_call.1} parent=47 // pred_check
          %p381 = pneg %p84
        $region54: #{tpu_custom_call.1} parent=47 // pred_check_branch
          %383 = sbr.rel (%p381) target = $region56
        $region55: #{tpu_custom_call.1} parent=47 // pred_region
          %s384 = sand.u32 %s26, 1
          %s385 = scalar_lea.sflag [#allocation9], %s384
          %s386 = sand.u32 %s74, 1
          %s387 = scalar_lea.vmem [#allocation8], %s386
          %389 = vsyncadd %s385, 0
          %s390 = scalar_lea.hbm %s1, %s33
          %s392 = sshll.u32 %s390, 4
          %s393 = int_to_ptr.hbm [resolvable:$true] %s392
          %s394 = sshll.u32 %s387, 4
          %s395 = int_to_ptr.vmem [resolvable:$true] %s394
          %397 = dma.hbm_to_vmem [thread:$0]  %s393, 16, %s395, %s385
        $region56: #{tpu_custom_call.1} parent=47 // pred_fallthru
          _
      $region48: #{tpu_custom_call.1} parent=5 // pred_fallthru
        _
      %p398 = scmp.le.s32.totalorder 1, %s26
      %p399 = scmp.lt.s32.totalorder %s26, 3
      %p400 = pnand %p398, %p399
      %p401 = pneg %p400
      // Predicated region
      $region57: #{tpu_custom_call.1} parent=5 // pred_check
        _
      $region58: #{tpu_custom_call.1} parent=5 // pred_check_branch
        %403 = sbr.rel (%p400) target = $region60
      $region59: #{tpu_custom_call.1} parent=5 // pred_region
        %s404 = ssub.s32 %s26, 1
        %s405 = sand.u32 %s51, 1
        %s406 = scalar_lea.sflag [#allocation6], %s405
        %s407 = sand.u32 %s51, 1
        %s408 = smul.addr %s407, 8
        %s409 = scalar_lea.vmem [#allocation5], %s408
        // Predicated region
        $region61: #{tpu_custom_call.1} parent=59 // pred_check
          %p410 = pneg %p64
        $region62: #{tpu_custom_call.1} parent=59 // pred_check_branch
          %412 = sbr.rel (%p410) target = $region64
        $region63: #{tpu_custom_call.1} parent=59 // pred_region
          %414 = dma.done %s406, 128
        $region64: #{tpu_custom_call.1} parent=59 // pred_fallthru
          _
        %s415 = sand.u32 %s31, 1
        %s416 = scalar_lea.sflag [#allocation9], %s415
        %s417 = sand.u32 %s77, 1
        %s418 = scalar_lea.vmem [#allocation8], %s417
        // Predicated region
        $region65: #{tpu_custom_call.1} parent=59 // pred_check
          %p419 = pneg %p90
        $region66: #{tpu_custom_call.1} parent=59 // pred_check_branch
          %421 = sbr.rel (%p419) target = $region68
        $region67: #{tpu_custom_call.1} parent=59 // pred_region
          %423 = dma.done %s416, 16
        $region68: #{tpu_custom_call.1} parent=59 // pred_fallthru
          _
        // Predicated region
        $region69: #{tpu_custom_call.1} parent=59 // pred_check
          %p424 = pneg %p111
        $region70: #{tpu_custom_call.1} parent=59 // pred_check_branch
          %426 = sbr.rel (%p424) target = $region72
        $region71: #{tpu_custom_call.1} parent=59 // pred_region
          %428 = dma.done [#allocation9], 256
        $region72: #{tpu_custom_call.1} parent=59 // pred_fallthru
          _
        // Predicated region
        $region73: #{tpu_custom_call.1} parent=59 // pred_check
          %p429 = pneg %p153
        $region74: #{tpu_custom_call.1} parent=59 // pred_check_branch
          %431 = sbr.rel (%p429) target = $region76
        $region75: #{tpu_custom_call.1} parent=59 // pred_region
          %433 = dma.done [#allocation12], 256
        $region76: #{tpu_custom_call.1} parent=59 // pred_fallthru
          _
        // Predicated region
        $region77: #{tpu_custom_call.1} parent=59 // pred_check
          %p434 = pneg %p195
        $region78: #{tpu_custom_call.1} parent=59 // pred_check_branch
          %436 = sbr.rel (%p434) target = $region80
        $region79: #{tpu_custom_call.1} parent=59 // pred_region
          %438 = dma.done [#allocation12], 256
        $region80: #{tpu_custom_call.1} parent=59 // pred_fallthru
          _
        %s439 = sand.u32 %s51, 1
        %s440 = scalar_lea.sflag [#allocation6], %s439
        %s441 = sand.u32 %s51, 1
        %s442 = smul.addr %s441, 8
        %s443 = scalar_lea.vmem [#allocation5], %s442
        %p444 = pneg %p64
        %p445 = pneg %p61
        %s446 = sand.u32 %s31, 1
        %s447 = scalar_lea.sflag [#allocation9], %s446
        %s448 = sand.u32 %s77, 1
        %s449 = scalar_lea.vmem [#allocation8], %s448
        %p450 = pneg %p90
        %p451 = pneg %p87
        %p452 = pneg %p111
        %p453 = pneg %p108
        %p454 = pneg %p132
        %p455 = pneg %p129
        %p456 = pneg %p153
        %p457 = pneg %p150
        %p458 = pneg %p174
        %p459 = pneg %p171
        %p460 = pneg %p195
        %p461 = pneg %p192
        %p462 = pneg %p216
        %p463 = pneg %p213
        %p464 = pneg %p237
        %p465 = pneg %p234
        %p466 = pneg %p258
        %p467 = pneg %p255
        %p468 = pneg %p286
        %p469 = pneg %p283
        %s470 = sand.u32 %s273, 1
        %s471 = scalar_lea.sflag [#allocation7], %s470
        %s472 = sand.u32 %s273, 1
        %s473 = smul.addr %s472, 8
        %s474 = scalar_lea.vmem [#allocation14], %s473
        %p476 = scmp.eq.s32.totalorder %s36, 0
        // Predicated region
        $region81: #{tpu_custom_call.1} parent=59 // pred_check
          %p477 = pneg %p476
        $region82: #{tpu_custom_call.1} parent=59 // pred_check_branch
          %479 = sbr.rel (%p477) target = $region84
        $region83: #{tpu_custom_call.1} parent=59 // pred_region
          %v480 = vld [vmem:[%s409] sm:$0xff]
          %v481 = vpack.c.bf16 %v480, %v480
          %v482 = vld [vmem:[#allocation11] sm:$0xf]
          %v483 = vld [vmem:[#allocation11 + $0x4] sm:$0xf]
          %v484 = vld [vmem:[#allocation11 + $0x8] sm:$0xf]
          %v485 = vld [vmem:[#allocation11 + $0xc] sm:$0xf]
          %v486 = vld [vmem:[%s5] sm:$0x1]
          %v488 = vperm.slane %v486, 0
          %v494 = vunpack.c.l.b16 %v482
          %v495 = vunpack.c.l.b16 %v483
          %v496 = vunpack.c.l.b16 %v484
          %v497 = vunpack.c.l.b16 %v485
          %v498 = vpack.c.b16 %v495, %v494
          %v499 = vpack.c.b16 %v497, %v496
          %vm502 = vcmask 261120
          %v504 = vsel %vm502, %v481, 0
          %506 = vmatpush.bf16.msra.mxu0 0
          %507 = vmatpush.bf16.msra.mxu0 0
          %508 = vmatpush.bf16.msra.mxu0 0
          %509 = vmatpush.bf16.msra.mxu0 0
          %510 = vmatpush.bf16.msra.mxu0 0
          %511 = vmatpush.bf16.msra.mxu0 0
          %512 = vmatpush.bf16.msra.mxu0 %v499
          %513 = vmatpush.bf16.msra.mxu0 %v498
          %514 = vmatmul.bf16.gmra.mxu0 %v504
          %v515 = vpop.f32.mrf.mxu0
          %v516 = vadd.f32 %v488, %v515
          %v517 = vpop.f32.mrf.mxu0
          %518 = vdwg.mxu0
          %v519 = vpack.c.bf16 %v516, %v516
          %vm520 = vcmask 60416
          %521 = vst.msk [vmem:[#allocation3] sm:$0xf] %vm520, %v519
          %523 = vrot.lane.b32.xlu0 %v519, 96
          %v524 = vpop.permute.xlu0 %523
          %526 = vst.msk [vmem:[#allocation4] sm:$0xf] %vm520, %v524
          %527 = vrot.lane.b32.xlu0 %v519, 120
          %v528 = vpop.permute.xlu0 %527
          %s530 = scalar_lea.vmem [#allocation3], 4
          %531 = vst.msk [vmem:[%s530] sm:$0xf] %vm520, %v528
          %532 = vrot.lane.b32.xlu0 %v519, 88
          %v533 = vpop.permute.xlu0 %532
          %s535 = scalar_lea.vmem [#allocation4], 4
          %536 = vst.msk [vmem:[%s535] sm:$0xf] %vm520, %v533
          %537 = vrot.lane.b32.xlu0 %v519, 112
          %v538 = vpop.permute.xlu0 %537
          %s540 = scalar_lea.vmem [#allocation3], 8
          %541 = vst.msk [vmem:[%s540] sm:$0xf] %vm520, %v538
          %542 = vrot.lane.b32.xlu0 %v519, 80
          %v543 = vpop.permute.xlu0 %542
          %s545 = scalar_lea.vmem [#allocation4], 8
          %546 = vst.msk [vmem:[%s545] sm:$0xf] %vm520, %v543
          %547 = vrot.lane.b32.xlu0 %v519, 104
          %v548 = vpop.permute.xlu0 %547
          %s550 = scalar_lea.vmem [#allocation3], 12
          %551 = vst.msk [vmem:[%s550] sm:$0xf] %vm520, %v548
          %552 = vrot.lane.b32.xlu0 %v519, 72
          %v553 = vpop.permute.xlu0 %552
          %s555 = scalar_lea.vmem [#allocation4], 12
          %556 = vst.msk [vmem:[%s555] sm:$0xf] %vm520, %v553
        $region84: #{tpu_custom_call.1} parent=59 // pred_fallthru
          _
        %s557 = smul.u32 %s36, 8
        %s558 = scalar_lea.vmem %s409, %s557 [#allocation5]
        %v559 = vld [vmem:[%s558] sm:$0xff]
        %v560 = vpack.c.bf16 %v559, %v559
        %v561 = vld [vmem:[#allocation10] sm:$0xf]
        %v562 = vld [vmem:[#allocation10 + $0x4] sm:$0xf]
        %v563 = vld [vmem:[#allocation10 + $0x8] sm:$0xf]
        %v564 = vld [vmem:[#allocation10 + $0xc] sm:$0xf]
        %v565 = vld [vmem:[%s3] sm:$0x1]
        %v567 = vperm.slane %v565, 0
        %v573 = vunpack.c.l.b16 %v561
        %v574 = vunpack.c.l.b16 %v562
        %v575 = vunpack.c.l.b16 %v563
        %v576 = vunpack.c.l.b16 %v564
        %v577 = vpack.c.b16 %v574, %v573
        %v578 = vpack.c.b16 %v576, %v575
        %vm581 = vcmask 261120
        %v583 = vsel %vm581, %v560, 0
        %585 = vmatpush.bf16.msra.mxu0 0
        %586 = vmatpush.bf16.msra.mxu0 0
        %587 = vmatpush.bf16.msra.mxu0 0
        %588 = vmatpush.bf16.msra.mxu0 0
        %589 = vmatpush.bf16.msra.mxu0 0
        %590 = vmatpush.bf16.msra.mxu0 0
        %591 = vmatpush.bf16.msra.mxu0 %v578
        %592 = vmatpush.bf16.msra.mxu0 %v577
        %593 = vmatmul.bf16.gmra.mxu0 %v583
        %v594 = vpop.f32.mrf.mxu0
        %v595 = vadd.f32 %v567, %v594
        %v596 = vpop.f32.mrf.mxu0
        %597 = vdwg.mxu0
        %v598 = vpack.c.bf16 %v595, %v595
        %v599 = vld [vmem:[%s418] sm:$0x1]
        %v600 = vsub.f32 1.0, %v599
        %v601 = vmul.f32 %v600, -10000.0
        %v603 = vperm.slane %v601, 0
        %v605 = vld [vmem:[#allocation3] sm:$0xf]
        %v606 = vld [vmem:[#allocation4] sm:$0xf]
        %vm607 = vcmask 64512
        %v609 = vsel %vm607, %v598, 0
        %v612 = vsel %vm607, %v605, 0
        %614 = vmatpush.bf16.xpose.msra.mxu0 0
        %615 = vmatpush.bf16.xpose.msra.mxu0 0
        %616 = vmatpush.bf16.xpose.msra.mxu0 0
        %617 = vmatpush.bf16.xpose.msra.mxu0 0
        %618 = vmatpush.bf16.xpose.msra.mxu0 0
        %619 = vmatpush.bf16.xpose.msra.mxu0 0
        %620 = vmatpush.bf16.xpose.msra.mxu0 0
        %621 = vmatpush.bf16.xpose.msra.mxu0 %v612
        %622 = vmatmul.bf16.gmra.mxu0 %v609
        %v623 = vpop.f32.mrf.mxu0
        %v624 = vadd.f32 %v603, %v623
        %v625 = vpop.f32.mrf.mxu0
        %626 = vdwg.mxu0
        %v627 = vsel %vm607, %v624, -inf
        %628 = vmax.xlane.f32.xlu0 %v627
        %v629 = vpop.xlane.xlu0 %628
        %v630 = vsub.f32 %v624, %v629
        %v631 = vmul.f32 %v630, 1.442695
        %v632 = vpow.pop %v631
        %v633 = vsel %vm607, %v632, 0.0
        %634 = vadd.xlane.f32.xlu0 %v633
        %v635 = vpop.xlane.xlu0 %634
        %v636 = vrcp.pop %v635
        %v637 = vpack.c.bf16 %v632, %v632
        %v639 = vsel %vm607, %v637, 0
        %vm641 = vcmask 1043456
        %v643 = vsel %vm641, %v606, 0
        %645 = vmatpush.bf16.msra.mxu0 0
        %646 = vmatpush.bf16.msra.mxu0 0
        %647 = vmatpush.bf16.msra.mxu0 0
        %648 = vmatpush.bf16.msra.mxu0 0
        %649 = vmatpush.bf16.msra.mxu0 0
        %650 = vmatpush.bf16.msra.mxu0 0
        %651 = vmatpush.bf16.msra.mxu0 0
        %652 = vmatpush.bf16.msra.mxu0 %v643
        %653 = vmatmul.bf16.gmra.mxu0 %v639
        %v654 = vpop.f32.mrf.mxu0
        %v655 = vadd.f32 0.0, %v654
        %v656 = vpop.f32.mrf.mxu0
        %657 = vdwg.mxu0
        %v658 = vmul.f32 %v655, %v636
        %v659 = vpack.c.bf16 %v658, %v658
        %vm660 = vcmask 60416
        %661 = vst.msk [vmem:[#allocation2] sm:$0xf] %vm660, %v659
        %s662 = scalar_lea.vmem [#allocation3], 4
        %v663 = vld [vmem:[%s662] sm:$0xf]
        %s664 = scalar_lea.vmem [#allocation4], 4
        %v665 = vld [vmem:[%s664] sm:$0xf]
        %v667 = vunpack.c.l.b16 %v598
        %v668 = vpack.c.b16 %v667, %v667
        %669 = vrot.lane.b32.xlu0 %v668, 120
        %v670 = vpop.permute.xlu0 %669
        %v672 = vsel %vm607, %v670, 0
        %v675 = vsel %vm607, %v663, 0
        %677 = vmatpush.bf16.xpose.msra.mxu0 0
        %678 = vmatpush.bf16.xpose.msra.mxu0 0
        %679 = vmatpush.bf16.xpose.msra.mxu0 0
        %680 = vmatpush.bf16.xpose.msra.mxu0 0
        %681 = vmatpush.bf16.xpose.msra.mxu0 0
        %682 = vmatpush.bf16.xpose.msra.mxu0 0
        %683 = vmatpush.bf16.xpose.msra.mxu0 0
        %684 = vmatpush.bf16.xpose.msra.mxu0 %v675
        %685 = vmatmul.bf16.gmra.mxu0 %v672
        %v686 = vpop.f32.mrf.mxu0
        %v687 = vadd.f32 %v603, %v686
        %v688 = vpop.f32.mrf.mxu0
        %689 = vdwg.mxu0
        %v690 = vsel %vm607, %v687, -inf
        %691 = vmax.xlane.f32.xlu0 %v690
        %v692 = vpop.xlane.xlu0 %691
        %v693 = vsub.f32 %v687, %v692
        %v694 = vmul.f32 %v693, 1.442695
        %v695 = vpow.pop %v694
        %v696 = vsel %vm607, %v695, 0.0
        %697 = vadd.xlane.f32.xlu0 %v696
        %v698 = vpop.xlane.xlu0 %697
        %v699 = vrcp.pop %v698
        %v700 = vpack.c.bf16 %v695, %v695
        %v702 = vsel %vm607, %v700, 0
        %v705 = vsel %vm641, %v665, 0
        %707 = vmatpush.bf16.msra.mxu0 0
        %708 = vmatpush.bf16.msra.mxu0 0
        %709 = vmatpush.bf16.msra.mxu0 0
        %710 = vmatpush.bf16.msra.mxu0 0
        %711 = vmatpush.bf16.msra.mxu0 0
        %712 = vmatpush.bf16.msra.mxu0 0
        %713 = vmatpush.bf16.msra.mxu0 0
        %714 = vmatpush.bf16.msra.mxu0 %v705
        %715 = vmatmul.bf16.gmra.mxu0 %v702
        %v716 = vpop.f32.mrf.mxu0
        %v717 = vadd.f32 0.0, %v716
        %v718 = vpop.f32.mrf.mxu0
        %719 = vdwg.mxu0
        %v720 = vmul.f32 %v717, %v699
        %v721 = vpack.c.bf16 %v720, %v720
        %723 = vrot.lane.b32.xlu0 %v721, 8
        %v724 = vpop.permute.xlu0 %723
        %vm726 = vcmask 126016
        %727 = vst.msk [vmem:[#allocation2] sm:$0xf] %vm726, %v724
        %s728 = scalar_lea.vmem [#allocation3], 8
        %v729 = vld [vmem:[%s728] sm:$0xf]
        %s730 = scalar_lea.vmem [#allocation4], 8
        %v731 = vld [vmem:[%s730] sm:$0xf]
        %732 = vrot.lane.b32.xlu0 %v668, 112
        %v733 = vpop.permute.xlu0 %732
        %v735 = vsel %vm607, %v733, 0
        %v738 = vsel %vm607, %v729, 0
        %740 = vmatpush.bf16.xpose.msra.mxu0 0
        %741 = vmatpush.bf16.xpose.msra.mxu0 0
        %742 = vmatpush.bf16.xpose.msra.mxu0 0
        %743 = vmatpush.bf16.xpose.msra.mxu0 0
        %744 = vmatpush.bf16.xpose.msra.mxu0 0
        %745 = vmatpush.bf16.xpose.msra.mxu0 0
        %746 = vmatpush.bf16.xpose.msra.mxu0 0
        %747 = vmatpush.bf16.xpose.msra.mxu0 %v738
        %748 = vmatmul.bf16.gmra.mxu0 %v735
        %v749 = vpop.f32.mrf.mxu0
        %v750 = vadd.f32 %v603, %v749
        %v751 = vpop.f32.mrf.mxu0
        %752 = vdwg.mxu0
        %v753 = vsel %vm607, %v750, -inf
        %754 = vmax.xlane.f32.xlu0 %v753
        %v755 = vpop.xlane.xlu0 %754
        %v756 = vsub.f32 %v750, %v755
        %v757 = vmul.f32 %v756, 1.442695
        %v758 = vpow.pop %v757
        %v759 = vsel %vm607, %v758, 0.0
        %760 = vadd.xlane.f32.xlu0 %v759
        %v761 = vpop.xlane.xlu0 %760
        %v762 = vrcp.pop %v761
        %v763 = vpack.c.bf16 %v758, %v758
        %v765 = vsel %vm607, %v763, 0
        %v768 = vsel %vm641, %v731, 0
        %770 = vmatpush.bf16.msra.mxu0 0
        %771 = vmatpush.bf16.msra.mxu0 0
        %772 = vmatpush.bf16.msra.mxu0 0
        %773 = vmatpush.bf16.msra.mxu0 0
        %774 = vmatpush.bf16.msra.mxu0 0
        %775 = vmatpush.bf16.msra.mxu0 0
        %776 = vmatpush.bf16.msra.mxu0 0
        %777 = vmatpush.bf16.msra.mxu0 %v768
        %778 = vmatmul.bf16.gmra.mxu0 %v765
        %v779 = vpop.f32.mrf.mxu0
        %v780 = vadd.f32 0.0, %v779
        %v781 = vpop.f32.mrf.mxu0
        %782 = vdwg.mxu0
        %v783 = vmul.f32 %v780, %v762
        %v784 = vpack.c.bf16 %v783, %v783
        %786 = vrot.lane.b32.xlu0 %v784, 16
        %v787 = vpop.permute.xlu0 %786
        %vm789 = vcmask 191616
        %790 = vst.msk [vmem:[#allocation2] sm:$0xf] %vm789, %v787
        %s791 = scalar_lea.vmem [#allocation3], 12
        %v792 = vld [vmem:[%s791] sm:$0xf]
        %s793 = scalar_lea.vmem [#allocation4], 12
        %v794 = vld [vmem:[%s793] sm:$0xf]
        %795 = vrot.lane.b32.xlu0 %v668, 104
        %v796 = vpop.permute.xlu0 %795
        %v798 = vsel %vm607, %v796, 0
        %v801 = vsel %vm607, %v792, 0
        %803 = vmatpush.bf16.xpose.msra.mxu0 0
        %804 = vmatpush.bf16.xpose.msra.mxu0 0
        %805 = vmatpush.bf16.xpose.msra.mxu0 0
        %806 = vmatpush.bf16.xpose.msra.mxu0 0
        %807 = vmatpush.bf16.xpose.msra.mxu0 0
        %808 = vmatpush.bf16.xpose.msra.mxu0 0
        %809 = vmatpush.bf16.xpose.msra.mxu0 0
        %810 = vmatpush.bf16.xpose.msra.mxu0 %v801
        %811 = vmatmul.bf16.gmra.mxu0 %v798
        %v812 = vpop.f32.mrf.mxu0
        %v813 = vadd.f32 %v603, %v812
        %v814 = vpop.f32.mrf.mxu0
        %815 = vdwg.mxu0
        %v816 = vsel %vm607, %v813, -inf
        %817 = vmax.xlane.f32.xlu0 %v816
        %v818 = vpop.xlane.xlu0 %817
        %v819 = vsub.f32 %v813, %v818
        %v820 = vmul.f32 %v819, 1.442695
        %v821 = vpow.pop %v820
        %v822 = vsel %vm607, %v821, 0.0
        %823 = vadd.xlane.f32.xlu0 %v822
        %v824 = vpop.xlane.xlu0 %823
        %v825 = vrcp.pop %v824
        %v826 = vpack.c.bf16 %v821, %v821
        %v828 = vsel %vm607, %v826, 0
        %v831 = vsel %vm641, %v794, 0
        %833 = vmatpush.bf16.msra.mxu0 0
        %834 = vmatpush.bf16.msra.mxu0 0
        %835 = vmatpush.bf16.msra.mxu0 0
        %836 = vmatpush.bf16.msra.mxu0 0
        %837 = vmatpush.bf16.msra.mxu0 0
        %838 = vmatpush.bf16.msra.mxu0 0
        %839 = vmatpush.bf16.msra.mxu0 0
        %840 = vmatpush.bf16.msra.mxu0 %v831
        %841 = vmatmul.bf16.gmra.mxu0 %v828
        %v842 = vpop.f32.mrf.mxu0
        %v843 = vadd.f32 0.0, %v842
        %v844 = vpop.f32.mrf.mxu0
        %845 = vdwg.mxu0
        %v846 = vmul.f32 %v843, %v825
        %v847 = vpack.c.bf16 %v846, %v846
        %849 = vrot.lane.b32.xlu0 %v847, 24
        %v850 = vpop.permute.xlu0 %849
        %vm852 = vcmask 257216
        %853 = vst.msk [vmem:[#allocation2] sm:$0xf] %vm852, %v850
        %v854 = vld [vmem:[#allocation2] sm:$0xf]
        %v855 = vld [vmem:[#allocation13] sm:$0xf]
        %v856 = vld [vmem:[#allocation13 + $0x4] sm:$0xf]
        %v857 = vld [vmem:[#allocation13 + $0x8] sm:$0xf]
        %v858 = vld [vmem:[#allocation13 + $0xc] sm:$0xf]
        %v859 = vld [vmem:[%s7] sm:$0x1]
        %v861 = vperm.slane %v859, 0
        %v867 = vunpack.c.l.b16 %v855
        %v868 = vunpack.c.l.b16 %v856
        %v869 = vunpack.c.l.b16 %v857
        %v870 = vunpack.c.l.b16 %v858
        %v871 = vpack.c.b16 %v868, %v867
        %v872 = vpack.c.b16 %v870, %v869
        %v876 = vsel %vm581, %v854, 0
        %878 = vmatpush.bf16.msra.mxu0 0
        %879 = vmatpush.bf16.msra.mxu0 0
        %880 = vmatpush.bf16.msra.mxu0 0
        %881 = vmatpush.bf16.msra.mxu0 0
        %882 = vmatpush.bf16.msra.mxu0 0
        %883 = vmatpush.bf16.msra.mxu0 0
        %884 = vmatpush.bf16.msra.mxu0 %v872
        %885 = vmatpush.bf16.msra.mxu0 %v871
        %886 = vmatmul.bf16.gmra.mxu0 %v876
        %v887 = vpop.f32.mrf.mxu0
        %v888 = vadd.f32 %v861, %v887
        %v889 = vpop.f32.mrf.mxu0
        %890 = vdwg.mxu0
        %v891 = vadd.f32 %v888, %v559
        %v892 = vsel %vm581, %v891, 0.0
        %893 = vadd.xlane.f32.xlu0 %v892
        %v894 = vpop.xlane.xlu0 %893
        %v895 = vrcp.pop 32.0
        %v896 = vmul.f32 32.0, %v895
        %v897 = vsub.f32 1.0, %v896
        %v898 = vmul.f32 %v895, %v897
        %v899 = vadd.f32 %v895, %v898
        %vm900 = vweird.f32 %v895
        %v901 = vsel %vm900, %v895, %v899
        %v902 = vmul.f32 %v894, %v901
        %v903 = vsub.f32 %v891, %v902
        %v904 = vmul.f32 %v903, %v903
        %v905 = vsel %vm581, %v904, 0.0
        %906 = vadd.xlane.f32.xlu0 %v905
        %v907 = vpop.xlane.xlu0 %906
        %v908 = vmul.f32 %v907, %v901
        %v909 = vadd.f32 %v908, 1e-12
        %v910 = vrsqrt.pop %v909
        %v911 = vmul.f32 %v910, %v909
        %v912 = vmul.f32 %v911, %v910
        %v913 = vmul.f32 0.5, %v912
        %v914 = vsub.f32 1.5, %v913
        %v915 = vmul.f32 %v910, %v914
        %vm916 = vweird.f32 %v909
        %vm917 = vweird.f32 %v910
        %vm918 = vmor %vm916, %vm917
        %v919 = vsel %vm918, %v910, %v915
        %v920 = vmul.f32 %v903, %v919
        %v921 = vld [vmem:[%s8] sm:$0x1]
        %v923 = vperm.slane %v921, 0
        %v925 = vmul.f32 %v920, %v923
        %v926 = vld [vmem:[%s9] sm:$0x1]
        %v928 = vperm.slane %v926, 0
        %v930 = vadd.f32 %v925, %v928
        %931 = vst.msk [vmem:[%s474] sm:$0xff] %vm581, %v930
        %s932 = sand.u32 %s273, 1
        %s933 = scalar_lea.sflag [#allocation7], %s932
        %s934 = sand.u32 %s273, 1
        %s935 = smul.addr %s934, 8
        %s936 = scalar_lea.vmem [#allocation14], %s935
        // Predicated region
        $region85: #{tpu_custom_call.1} parent=59 // pred_check
          %p937 = pneg %p283
        $region86: #{tpu_custom_call.1} parent=59 // pred_check_branch
          %939 = sbr.rel (%p937) target = $region88
        $region87: #{tpu_custom_call.1} parent=59 // pred_region
          %941 = vsyncadd %s933, 0
          %s942 = sadd.s32 %s36, %s35
          %s943 = smul.addr %s942, 8
          %s944 = scalar_lea.hbm %s10, %s943
          %s946 = sshll.u32 %s936, 4
          %s947 = int_to_ptr.vmem [resolvable:$true] %s946
          %s948 = sshll.u32 %s944, 4
          %s949 = int_to_ptr.hbm [resolvable:$true] %s948
          %951 = dma.vmem_to_hbm [thread:$0]  %s947, 128, %s949, %s933
        $region88: #{tpu_custom_call.1} parent=59 // pred_fallthru
          _
      $region60: #{tpu_custom_call.1} parent=5 // pred_fallthru
        _
      %p952 = scmp.le.s32.totalorder 2, %s26
      // Predicated region
      $region89: #{tpu_custom_call.1} parent=5 // pred_check
        %p953 = pneg %p952
      $region90: #{tpu_custom_call.1} parent=5 // pred_check_branch
        %955 = sbr.rel (%p953) target = $region92
      $region91: #{tpu_custom_call.1} parent=5 // pred_region
        %s956 = ssub.s32 %s26, 2
        // Predicated region
        $region93: #{tpu_custom_call.1} parent=91 // pred_check
          %p957 = pneg %p289
        $region94: #{tpu_custom_call.1} parent=91 // pred_check_branch
          %959 = sbr.rel (%p957) target = $region96
        $region95: #{tpu_custom_call.1} parent=91 // pred_region
          %s960 = sand.u32 %s274, 1
          %s961 = scalar_lea.sflag [#allocation7], %s960
          %s962 = sand.u32 %s274, 1
          %s963 = smul.addr %s962, 8
          %s964 = scalar_lea.vmem [#allocation14], %s963
          %966 = dma.done %s961, 128
        $region96: #{tpu_custom_call.1} parent=91 // pred_fallthru
          _
      $region92: #{tpu_custom_call.1} parent=5 // pred_fallthru
        _
    $region6: #{tpu_custom_call.1} parent=1 // loop_footer
      %s30 = sadd.s32 1, %s26
    $region7: #{tpu_custom_call.1} parent=1 // loop_footer_branch
      %25 = sbr.rel target = $region3
    $region8: #{tpu_custom_call.1} parent=1 // loop_exit
      _
    %967 = vsyncpa [#allocation6], 1
    %s968 = scalar_lea.sflag [#allocation6], 1
    %969 = vsyncpa %s968, 1
    %970 = vsyncpa [#allocation9], 1
    %s971 = scalar_lea.sflag [#allocation9], 1
    %972 = vsyncpa %s971, 1
    %973 = vsyncpa [#allocation12], 1
    %974 = vsyncpa [#allocation7], 1
    %s975 = scalar_lea.sflag [#allocation7], 1
    %976 = vsyncpa %s975, 1

</llo_original>
